<compile_context>
chip_gen: v6e
topology: v6e:2x2x1
jax: 0.10.0
libtpu: 0.0.40
codegen_flags: <defaults>
</compile_context>

<pallas_src>
import jax
import jax.numpy as jnp
from jax.experimental import pallas as pl
from jax.experimental.pallas import tpu as pltpu

NEG_SLOPE = 0.01   # F.leaky_relu default
BN_EPS = 1e-5      # torch.nn.BatchNorm1d default


def _leaky_relu(x):
    return jnp.where(x >= 0, x, NEG_SLOPE * x)


# ---------------------------------------------------------------------------
# Kernel 1: fully fused 3-layer graph tower (per tower, selected by grid axis)
# ---------------------------------------------------------------------------
def tower_kernel(x_ref, a_ref,
                 w0r_ref, w0s_ref, w1r_ref, w1s_ref, w2r_ref, w2s_ref,
                 ep_ref, out_ref):
    a = a_ref[0]                              # (N, N) bf16, consumed as-is by the MXU
    ep = ep_ref[0]                            # (16, H); rows 3l+{0:bias,1:scale,2:shift}

    def conv(h_in, wrel_ref, wroot_ref):
        # GraphConv: (A @ h) @ W_rel + h @ W_root  (two accumulated dots, no concat).
        # Aggregation runs bf16 x bf16 -> f32 (A holds exact small integers).
        agg = jnp.dot(a, h_in.astype(jnp.bfloat16),
                      preferred_element_type=jnp.float32)
        return (jnp.dot(agg, wrel_ref[0], preferred_element_type=jnp.float32)
                + jnp.dot(h_in, wroot_ref[0], preferred_element_type=jnp.float32))

    def epilogue(h, layer):
        bias = ep[3 * layer:3 * layer + 1]
        scale = ep[3 * layer + 1:3 * layer + 2]
        shift = ep[3 * layer + 2:3 * layer + 3]
        h = _leaky_relu(h + bias)             # bias belongs to lin_rel (pre-activation)
        return h * scale + shift              # folded BatchNorm1d (eval)

    # Progressive 0.7/0.2/0.1 accumulation so h0/h1 die as early as possible.
    h0 = epilogue(conv(x_ref[0], w0r_ref, w0s_ref), 0)
    out_ref[0] = 0.7 * h0
    h1 = epilogue(conv(h0, w1r_ref, w1s_ref), 1)
    out_ref[0] += 0.2 * h1
    h2 = epilogue(conv(h1, w2r_ref, w2s_ref), 2)
    out_ref[0] += 0.1 * h2


def _tower_vmem_bytes(n, f_in, h):
    """Explicit scoped-VMEM budget (double-buffered inputs/outputs + live temps)."""
    a_b = n * n * 2                                    # bf16 adjacency
    x_b = n * f_in * 4
    w_b = 2 * (f_in * h + 2 * h * h) * 4               # W_rel + W_root, 3 layers
    ep_b = 16 * h * 4
    out_b = n * h * 4
    live = 6 * n * max(h, f_in) * 4                    # h_in / agg / cast temporaries
    budget = 2 * (a_b + x_b + w_b + ep_b + out_b) + live
    return int(min(max(budget + (8 << 20), 32 << 20), 100 << 20))


def run_towers(x_stack, a_stack, w_rel, w_root, ep_stack, core_parallel=False):
    """x_stack: (T, N, F_in) f32; a_stack: (T, N, N) bf16;
    w_rel/w_root: 3-tuples of (T, F_l, H); ep_stack: (T, 16, H)."""
    t, n, f_in = x_stack.shape
    h = w_rel[0].shape[-1]
    imap = lambda i: (i, 0, 0)

    w_args, w_specs = [], []
    for wr, ws in zip(w_rel, w_root):
        w_args += [wr, ws]
        w_specs += [pl.BlockSpec((1,) + wr.shape[1:], imap),
                    pl.BlockSpec((1,) + ws.shape[1:], imap)]

    # "parallel" is safe everywhere; on v7x pass core_parallel=True to shard the
    # two towers across the two TensorCores.
    dim_sem = (pltpu.CORE_PARALLEL,) if core_parallel else ("parallel",)

    return pl.pallas_call(
        tower_kernel,
        grid=(t,),
        in_specs=[pl.BlockSpec((1, n, f_in), imap),
                  pl.BlockSpec((1, n, n), imap)]
                 + w_specs
                 + [pl.BlockSpec((1, 16, h), imap)],
        out_specs=pl.BlockSpec((1, n, h), imap),
        out_shape=jax.ShapeDtypeStruct((t, n, h), jnp.float32),
        compiler_params=pltpu.CompilerParams(
            dimension_semantics=dim_sem,
            vmem_limit_bytes=_tower_vmem_bytes(n, f_in, h)),
    )(x_stack, a_stack, *w_args, ep_stack)


# ---------------------------------------------------------------------------
# Kernel 2: fused B-row DMA gather + concat + 4-layer MLP head (eval: no dropout)
# ---------------------------------------------------------------------------
def mlp_head_kernel(idx_ref, g_hbm, p_hbm,
                    w1g_ref, w1p_ref, b1_ref, w2_ref, b2_ref,
                    w3_ref, b3_ref, w4_ref, b4_ref, out_ref,
                    gbuf, pbuf, sems):
    b = out_ref.shape[0]
    # Gather only the B selected rows of each tower output straight from HBM.
    copies = []
    for i in range(b):                         # B is small and static -> unrolled
        cg = pltpu.make_async_copy(g_hbm.at[pl.ds(idx_ref[i, 0], 1)],
                                   gbuf.at[pl.ds(i, 1)], sems.at[0, i])
        cp = pltpu.make_async_copy(p_hbm.at[pl.ds(idx_ref[i, 1], 1)],
                                   pbuf.at[pl.ds(i, 1)], sems.at[1, i])
        cg.start()
        cp.start()
        copies += [cg, cp]
    for c in copies:
        c.wait()

    x_g = gbuf[...]                            # (B, H)
    x_p = pbuf[...]                            # (B, H)
    # dropout is identity in eval mode
    h = _leaky_relu(jnp.dot(x_g, w1g_ref[...], preferred_element_type=jnp.float32)
                    + jnp.dot(x_p, w1p_ref[...], preferred_element_type=jnp.float32)
                    + b1_ref[...])
    h = _leaky_relu(jnp.dot(h, w2_ref[...], preferred_element_type=jnp.float32)
                    + b2_ref[...])
    h = _leaky_relu(jnp.dot(h, w3_ref[...], preferred_element_type=jnp.float32)
                    + b3_ref[...])
    # lin4 padded to a lane-dense 128-wide output (cols >= 2 are zero)
    out_ref[...] = jnp.dot(h, w4_ref[...], preferred_element_type=jnp.float32) + b4_ref[...]


def mlp_head(gene_out, pheno_out, batch_idx, params):
    (w1, b1, w2, b2, w3, b3, w4, b4) = params
    h = gene_out.shape[1]
    b = batch_idx.shape[0]
    out_dim = w4.shape[1]
    out_pad = 128
    # split lin1 so the kernel never materializes the (B, 2H) concat
    w1g, w1p = w1[:h], w1[h:]
    # pad lin4 to 128 output lanes (unmasked vst), slice the 2 logits outside
    w4p = jnp.zeros((w4.shape[0], out_pad), jnp.float32).at[:, :out_dim].set(w4)
    b4p = jnp.zeros((1, out_pad), jnp.float32).at[:, :out_dim].set(b4)
    idx = batch_idx.astype(jnp.int32)

    vmem = pl.BlockSpec(memory_space=pltpu.MemorySpace.VMEM)
    smem = pl.BlockSpec(memory_space=pltpu.MemorySpace.SMEM)
    hbm = pl.BlockSpec(memory_space=pl.ANY)    # tower outputs stay in HBM; gather B rows

    out = pl.pallas_call(
        mlp_head_kernel,
        out_shape=jax.ShapeDtypeStruct((b, out_pad), jnp.float32),
        in_specs=[smem, hbm, hbm] + [vmem] * 9,
        out_specs=vmem,
        scratch_shapes=[
            pltpu.VMEM((b, h), jnp.float32),
            pltpu.VMEM((b, h), jnp.float32),
            pltpu.SemaphoreType.DMA((2, b)),
        ],
    )(idx, gene_out, pheno_out, w1g, w1p, b1, w2, b2, w3, b3, w4p, b4p)
    return out[:, :out_dim]


# ---------------------------------------------------------------------------
# Parameter construction + folding
# ---------------------------------------------------------------------------
def make_graph_layer_params(key, f_in, f_out):
    k = jax.random.split(key, 7)
    scale = 1.0 / jnp.sqrt(f_in)
    wrel = jax.random.uniform(k[0], (f_in, f_out), jnp.float32, -scale, scale)
    wroot = jax.random.uniform(k[1], (f_in, f_out), jnp.float32, -scale, scale)
    brel = jax.random.uniform(k[2], (1, f_out), jnp.float32, -scale, scale)
    gamma = 1.0 + 0.1 * jax.random.normal(k[3], (1, f_out), jnp.float32)
    beta = 0.1 * jax.random.normal(k[4], (1, f_out), jnp.float32)
    mean = 0.1 * jax.random.normal(k[5], (1, f_out), jnp.float32)
    var = 1.0 + 0.1 * jax.random.uniform(k[6], (1, f_out), jnp.float32)
    return dict(wrel=wrel, wroot=wroot, brel=brel,
                gamma=gamma, beta=beta, mean=mean, var=var)


def make_linear_params(key, f_in, f_out):
    k1, k2 = jax.random.split(key)
    scale = 1.0 / jnp.sqrt(f_in)
    w = jax.random.uniform(k1, (f_in, f_out), jnp.float32, -scale, scale)
    b = jax.random.uniform(k2, (1, f_out), jnp.float32, -scale, scale)
    return w, b


def fold_tower(layer_params):
    """Keep W_rel/W_root separate; fold BN(eval) into scale/shift; pack epilogue rows."""
    wrel = tuple(p['wrel'] for p in layer_params)
    wroot = tuple(p['wroot'] for p in layer_params)
    rows = []
    for p in layer_params:
        scale = p['gamma'] * jax.lax.rsqrt(p['var'] + BN_EPS)
        shift = p['beta'] - p['mean'] * scale
        rows.append(jnp.concatenate([p['brel'], scale, shift], axis=0))  # (3, H)
    h = wrel[0].shape[1]
    ep = jnp.zeros((16, h), jnp.float32).at[0:9].set(jnp.concatenate(rows, axis=0))
    return wrel, wroot, ep


def gnetdgp_forward(gene_x, gene_adj, pheno_x, pheno_adj, batch_idx,
                    gene_layers, pheno_layers, mlp_params, core_parallel=False):
    g_rel, g_root, g_ep = fold_tower(gene_layers)
    p_rel, p_root, p_ep = fold_tower(pheno_layers)
    same = (gene_x.shape == pheno_x.shape
            and all(a.shape == b.shape for a, b in zip(g_rel, p_rel)))
    if same:
        # Stack the two independent towers on a "parallel" grid axis.
        outs = run_towers(
            jnp.stack([gene_x, pheno_x]),
            jnp.stack([gene_adj, pheno_adj]).astype(jnp.bfloat16),
            tuple(jnp.stack([g, p]) for g, p in zip(g_rel, p_rel)),
            tuple(jnp.stack([g, p]) for g, p in zip(g_root, p_root)),
            jnp.stack([g_ep, p_ep]),
            core_parallel=core_parallel)
        gene_out, pheno_out = outs[0], outs[1]
    else:
        # TODO(synk): pad the smaller tower and take the stacked path (keeps the
        # v7x 2-TensorCore split and avoids a second pipeline warmup).
        gene_out = run_towers(gene_x[None], gene_adj.astype(jnp.bfloat16)[None],
                              tuple(w[None] for w in g_rel),
                              tuple(w[None] for w in g_root), g_ep[None])[0]
        pheno_out = run_towers(pheno_x[None], pheno_adj.astype(jnp.bfloat16)[None],
                               tuple(w[None] for w in p_rel),
                               tuple(w[None] for w in p_root), p_ep[None])[0]
    return mlp_head(gene_out, pheno_out, batch_idx, mlp_params)


# ---------------------------------------------------------------------------
# Plain-JAX reference (unfused / unfolded, mirrors the PyTorch module, f32)
# ---------------------------------------------------------------------------
def _ref_layer(x, a, p):
    h = (a @ x) @ p['wrel'] + x @ p['wroot'] + p['brel']
    h = jnp.where(h >= 0, h, NEG_SLOPE * h)
    return (h - p['mean']) * jax.lax.rsqrt(p['var'] + BN_EPS) * p['gamma'] + p['beta']


def _ref_forward(gene_x, gene_adj, pheno_x, pheno_adj, batch_idx,
                 gene_layers, pheno_layers, mlp_params):
    def tower(x, a, lp):
        h0 = _ref_layer(x, a, lp[0])
        h1 = _ref_layer(h0, a, lp[1])
        h2 = _ref_layer(h1, a, lp[2])
        return 0.7 * h0 + 0.2 * h1 + 0.1 * h2
    g = tower(gene_x, gene_adj, gene_layers)
    p = tower(pheno_x, pheno_adj, pheno_layers)
    x = jnp.concatenate([g[batch_idx[:, 0]], p[batch_idx[:, 1]]], axis=1)
    (w1, b1, w2, b2, w3, b3, w4, b4) = mlp_params
    lr = lambda v: jnp.where(v >= 0, v, NEG_SLOPE * v)
    h = lr(x @ w1 + b1)
    h = lr(h @ w2 + b2)
    h = lr(h @ w3 + b3)
    return h @ w4 + b4


# ---------------------------------------------------------------------------
if __name__ == "__main__":
    key = jax.random.PRNGKey(0)

    # Small shapes consistent with the module; lane-dense (multiples of 128).
    N_GENE, N_PHENO = 128, 128        # graph node counts
    GENE_FEAT, PHENO_FEAT = 128, 128  # gene_feature_dim, pheno_feature_dim
    HIDDEN = 128                      # gene/pheno_net_hidden_dim
    FC_HIDDEN = 512                   # fc_hidden_dim (lin2=256, lin3=128, lin4=2)
    BATCH = 8
    N_EDGES = 512

    keys = jax.random.split(key, 16)

    gene_x = jax.random.normal(keys[0], (N_GENE, GENE_FEAT), jnp.float32)
    pheno_x = jax.random.normal(keys[1], (N_PHENO, PHENO_FEAT), jnp.float32)

    # dense adjacency (A[dst, src] = edge multiplicity src->dst) from edge_index
    g_src = jax.random.randint(keys[2], (N_EDGES,), 0, N_GENE)
    g_dst = jax.random.randint(keys[3], (N_EDGES,), 0, N_GENE)
    gene_adj = jnp.zeros((N_GENE, N_GENE), jnp.float32).at[g_dst, g_src].add(1.0)
    p_src = jax.random.randint(keys[4], (N_EDGES,), 0, N_PHENO)
    p_dst = jax.random.randint(keys[5], (N_EDGES,), 0, N_PHENO)
    pheno_adj = jnp.zeros((N_PHENO, N_PHENO), jnp.float32).at[p_dst, p_src].add(1.0)

    # bf16 adjacency is exact only for integer multiplicities <= 256
    assert float(jnp.max(gene_adj)) <= 256.0 and float(jnp.max(pheno_adj)) <= 256.0

    batch_idx = jnp.stack(
        [jax.random.randint(keys[6], (BATCH,), 0, N_GENE),
         jax.random.randint(keys[7], (BATCH,), 0, N_PHENO)], axis=1)

    gene_layers = (
        make_graph_layer_params(keys[8], GENE_FEAT, HIDDEN),
        make_graph_layer_params(keys[9], HIDDEN, HIDDEN),
        make_graph_layer_params(keys[10], HIDDEN, HIDDEN),
    )
    pheno_layers = (
        make_graph_layer_params(keys[11], PHENO_FEAT, HIDDEN),
        make_graph_layer_params(keys[12], HIDDEN, HIDDEN),
        make_graph_layer_params(keys[13], HIDDEN, HIDDEN),
    )

    # MLP head: lin1(2H -> FC), lin2(FC -> FC/2), lin3(FC/2 -> FC/4), lin4 -> 2
    mk = jax.random.split(keys[14], 4)
    w1, b1 = make_linear_params(mk[0], 2 * HIDDEN, FC_HIDDEN)
    w2, b2 = make_linear_params(mk[1], FC_HIDDEN, FC_HIDDEN // 2)
    w3, b3 = make_linear_params(mk[2], FC_HIDDEN // 2, FC_HIDDEN // 4)
    w4, b4 = make_linear_params(mk[3], FC_HIDDEN // 4, 2)
    mlp_params = (w1, b1, w2, b2, w3, b3, w4, b4)

    out = gnetdgp_forward(gene_x, gene_adj, pheno_x, pheno_adj, batch_idx,
                          gene_layers, pheno_layers, mlp_params)
    out = jax.block_until_ready(out)

    # True-f32 reference (force highest matmul precision for the XLA ops).
    with jax.default_matmul_precision('float32'):
        ref = _ref_forward(gene_x, gene_adj, pheno_x, pheno_adj, batch_idx,
                           gene_layers, pheno_layers, mlp_params)
    ref = jax.block_until_ready(ref)

    assert out.shape == (BATCH, 2), out.shape
    max_err = jnp.max(jnp.abs(out - ref))
    # Kernel aggregates A @ h in bf16 (per perf review) -> tolerance reflects that.
    assert jnp.allclose(out, ref, atol=2e-2, rtol=2e-2), f"mismatch: max err {max_err}"

    print("KERNEL_OK")
</pallas_src>

<mosaic_0001>
module attributes {stable_mosaic.version = 11 : i64} {
  func.func @tower_kernel(%arg0: i32, %arg1: memref<1x128x128xf32, #tpu.memory_space<vmem>>, %arg2: memref<1x128x128xbf16, #tpu.memory_space<vmem>>, %arg3: memref<1x128x128xf32, #tpu.memory_space<vmem>>, %arg4: memref<1x128x128xf32, #tpu.memory_space<vmem>>, %arg5: memref<1x128x128xf32, #tpu.memory_space<vmem>>, %arg6: memref<1x128x128xf32, #tpu.memory_space<vmem>>, %arg7: memref<1x128x128xf32, #tpu.memory_space<vmem>>, %arg8: memref<1x128x128xf32, #tpu.memory_space<vmem>>, %arg9: memref<1x16x128xf32, #tpu.memory_space<vmem>>, %arg10: memref<1x128x128xf32, #tpu.memory_space<vmem>>) attributes {dimension_semantics = [#tpu.dimension_semantics<parallel>], iteration_bounds = array<i64: 2>, scalar_prefetch = 0 : i64, scratch_operands = 0 : i64, tpu.core_type = #tpu.core_type<tc>, window_params = [{transform_indices = @transform_0, window_bounds = array<i64: 1, 128, 128>}, {transform_indices = @transform_1, window_bounds = array<i64: 1, 128, 128>}, {transform_indices = @transform_2, window_bounds = array<i64: 1, 128, 128>}, {transform_indices = @transform_3, window_bounds = array<i64: 1, 128, 128>}, {transform_indices = @transform_4, window_bounds = array<i64: 1, 128, 128>}, {transform_indices = @transform_5, window_bounds = array<i64: 1, 128, 128>}, {transform_indices = @transform_6, window_bounds = array<i64: 1, 128, 128>}, {transform_indices = @transform_7, window_bounds = array<i64: 1, 128, 128>}, {transform_indices = @transform_8, window_bounds = array<i64: 1, 16, 128>}, {transform_indices = @transform_9, window_bounds = array<i64: 1, 128, 128>}]} {
    %c0 = arith.constant 0 : index
    %c0_0 = arith.constant 0 : index
    %c0_1 = arith.constant 0 : index
    %0 = vector.load %arg2[%c0, %c0_0, %c0_1] : memref<1x128x128xbf16, #tpu.memory_space<vmem>>, vector<1x128x128xbf16>
    %1 = vector.shape_cast %0 : vector<1x128x128xbf16> to vector<128x128xbf16>
    %c0_2 = arith.constant 0 : index
    %c0_3 = arith.constant 0 : index
    %c0_4 = arith.constant 0 : index
    %2 = vector.load %arg9[%c0_2, %c0_3, %c0_4] : memref<1x16x128xf32, #tpu.memory_space<vmem>>, vector<1x16x128xf32>
    %3 = vector.shape_cast %2 : vector<1x16x128xf32> to vector<16x128xf32>
    %c0_5 = arith.constant 0 : index
    %c0_6 = arith.constant 0 : index
    %c0_7 = arith.constant 0 : index
    %4 = vector.load %arg1[%c0_5, %c0_6, %c0_7] : memref<1x128x128xf32, #tpu.memory_space<vmem>>, vector<1x128x128xf32>
    %5 = vector.shape_cast %4 : vector<1x128x128xf32> to vector<128x128xf32>
    %6 = arith.truncf %5 : vector<128x128xf32> to vector<128x128xbf16>
    %cst = arith.constant dense<0.000000e+00> : vector<128x128xf32>
    %7 = tpu.matmul %1, %6, %cst {dimension_numbers = #tpu.dot_dimension_numbers<[1], [0], [0], [1], [0, 0, 1, 1], [], []>} : vector<128x128xbf16>, vector<128x128xbf16>, vector<128x128xf32> -> vector<128x128xf32>
    %c0_8 = arith.constant 0 : index
    %c0_9 = arith.constant 0 : index
    %c0_10 = arith.constant 0 : index
    %8 = vector.load %arg3[%c0_8, %c0_9, %c0_10] : memref<1x128x128xf32, #tpu.memory_space<vmem>>, vector<1x128x128xf32>
    %9 = vector.shape_cast %8 : vector<1x128x128xf32> to vector<128x128xf32>
    %cst_11 = arith.constant dense<0.000000e+00> : vector<128x128xf32>
    %10 = tpu.matmul %7, %9, %cst_11 {dimension_numbers = #tpu.dot_dimension_numbers<[1], [0], [0], [1], [0, 0, 1, 1], [], []>} : vector<128x128xf32>, vector<128x128xf32>, vector<128x128xf32> -> vector<128x128xf32>
    %c0_12 = arith.constant 0 : index
    %c0_13 = arith.constant 0 : index
    %c0_14 = arith.constant 0 : index
    %11 = vector.load %arg4[%c0_12, %c0_13, %c0_14] : memref<1x128x128xf32, #tpu.memory_space<vmem>>, vector<1x128x128xf32>
    %12 = vector.shape_cast %11 : vector<1x128x128xf32> to vector<128x128xf32>
    %cst_15 = arith.constant dense<0.000000e+00> : vector<128x128xf32>
    %13 = tpu.matmul %5, %12, %cst_15 {dimension_numbers = #tpu.dot_dimension_numbers<[1], [0], [0], [1], [0, 0, 1, 1], [], []>} : vector<128x128xf32>, vector<128x128xf32>, vector<128x128xf32> -> vector<128x128xf32>
    %14 = arith.addf %10, %13 : vector<128x128xf32>
    %15 = vector.extract_strided_slice %3 {offsets = [0, 0], sizes = [1, 128], strides = [1, 1]} : vector<16x128xf32> to vector<1x128xf32>
    %16 = vector.extract_strided_slice %3 {offsets = [1, 0], sizes = [1, 128], strides = [1, 1]} : vector<16x128xf32> to vector<1x128xf32>
    %17 = vector.extract_strided_slice %3 {offsets = [2, 0], sizes = [1, 128], strides = [1, 1]} : vector<16x128xf32> to vector<1x128xf32>
    %18 = vector.broadcast %15 : vector<1x128xf32> to vector<128x128xf32>
    %19 = arith.addf %14, %18 : vector<128x128xf32>
    %cst_16 = arith.constant 0.000000e+00 : f32
    %20 = vector.broadcast %cst_16 : f32 to vector<128x128xf32>
    %21 = arith.cmpf oge, %19, %20 : vector<128x128xf32>
    %cst_17 = arith.constant 0.00999999977 : f32
    %22 = vector.broadcast %cst_17 : f32 to vector<128x128xf32>
    %23 = arith.mulf %22, %19 : vector<128x128xf32>
    %24 = arith.select %21, %19, %23 : vector<128x128xi1>, vector<128x128xf32>
    %25 = vector.broadcast %16 : vector<1x128xf32> to vector<128x128xf32>
    %26 = arith.mulf %24, %25 : vector<128x128xf32>
    %27 = vector.broadcast %17 : vector<1x128xf32> to vector<128x128xf32>
    %28 = arith.addf %26, %27 : vector<128x128xf32>
    %cst_18 = arith.constant 0.699999988 : f32
    %29 = vector.broadcast %cst_18 : f32 to vector<128x128xf32>
    %30 = arith.mulf %29, %28 : vector<128x128xf32>
    %c0_19 = arith.constant 0 : index
    %c0_20 = arith.constant 0 : index
    %c0_21 = arith.constant 0 : index
    %31 = vector.load %arg10[%c0_19, %c0_20, %c0_21] : memref<1x128x128xf32, #tpu.memory_space<vmem>>, vector<1x128x128xf32>
    %32 = vector.shape_cast %31 : vector<1x128x128xf32> to vector<128x128xf32>
    %33 = vector.shape_cast %30 : vector<128x128xf32> to vector<1x128x128xf32>
    tpu.vector_store %arg10[%c0_19, %c0_20, %c0_21], %33 {strides = array<i32>} : memref<1x128x128xf32, #tpu.memory_space<vmem>>, vector<1x128x128xf32>,
    %34 = arith.truncf %28 : vector<128x128xf32> to vector<128x128xbf16>
    %cst_22 = arith.constant dense<0.000000e+00> : vector<128x128xf32>
    %35 = tpu.matmul %1, %34, %cst_22 {dimension_numbers = #tpu.dot_dimension_numbers<[1], [0], [0], [1], [0, 0, 1, 1], [], []>} : vector<128x128xbf16>, vector<128x128xbf16>, vector<128x128xf32> -> vector<128x128xf32>
    %c0_23 = arith.constant 0 : index
    %c0_24 = arith.constant 0 : index
    %c0_25 = arith.constant 0 : index
    %36 = vector.load %arg5[%c0_23, %c0_24, %c0_25] : memref<1x128x128xf32, #tpu.memory_space<vmem>>, vector<1x128x128xf32>
    %37 = vector.shape_cast %36 : vector<1x128x128xf32> to vector<128x128xf32>
    %cst_26 = arith.constant dense<0.000000e+00> : vector<128x128xf32>
    %38 = tpu.matmul %35, %37, %cst_26 {dimension_numbers = #tpu.dot_dimension_numbers<[1], [0], [0], [1], [0, 0, 1, 1], [], []>} : vector<128x128xf32>, vector<128x128xf32>, vector<128x128xf32> -> vector<128x128xf32>
    %c0_27 = arith.constant 0 : index
    %c0_28 = arith.constant 0 : index
    %c0_29 = arith.constant 0 : index
    %39 = vector.load %arg6[%c0_27, %c0_28, %c0_29] : memref<1x128x128xf32, #tpu.memory_space<vmem>>, vector<1x128x128xf32>
    %40 = vector.shape_cast %39 : vector<1x128x128xf32> to vector<128x128xf32>
    %cst_30 = arith.constant dense<0.000000e+00> : vector<128x128xf32>
    %41 = tpu.matmul %28, %40, %cst_30 {dimension_numbers = #tpu.dot_dimension_numbers<[1], [0], [0], [1], [0, 0, 1, 1], [], []>} : vector<128x128xf32>, vector<128x128xf32>, vector<128x128xf32> -> vector<128x128xf32>
    %42 = arith.addf %38, %41 : vector<128x128xf32>
    %43 = vector.extract_strided_slice %3 {offsets = [3, 0], sizes = [1, 128], strides = [1, 1]} : vector<16x128xf32> to vector<1x128xf32>
    %44 = vector.extract_strided_slice %3 {offsets = [4, 0], sizes = [1, 128], strides = [1, 1]} : vector<16x128xf32> to vector<1x128xf32>
    %45 = vector.extract_strided_slice %3 {offsets = [5, 0], sizes = [1, 128], strides = [1, 1]} : vector<16x128xf32> to vector<1x128xf32>
    %46 = vector.broadcast %43 : vector<1x128xf32> to vector<128x128xf32>
    %47 = arith.addf %42, %46 : vector<128x128xf32>
    %cst_31 = arith.constant 0.000000e+00 : f32
    %48 = vector.broadcast %cst_31 : f32 to vector<128x128xf32>
    %49 = arith.cmpf oge, %47, %48 : vector<128x128xf32>
    %cst_32 = arith.constant 0.00999999977 : f32
    %50 = vector.broadcast %cst_32 : f32 to vector<128x128xf32>
    %51 = arith.mulf %50, %47 : vector<128x128xf32>
    %52 = arith.select %49, %47, %51 : vector<128x128xi1>, vector<128x128xf32>
    %53 = vector.broadcast %44 : vector<1x128xf32> to vector<128x128xf32>
    %54 = arith.mulf %52, %53 : vector<128x128xf32>
    %55 = vector.broadcast %45 : vector<1x128xf32> to vector<128x128xf32>
    %56 = arith.addf %54, %55 : vector<128x128xf32>
    %c0_33 = arith.constant 0 : index
    %c0_34 = arith.constant 0 : index
    %c0_35 = arith.constant 0 : index
    %57 = vector.load %arg10[%c0_33, %c0_34, %c0_35] : memref<1x128x128xf32, #tpu.memory_space<vmem>>, vector<1x128x128xf32>
    %58 = vector.shape_cast %57 : vector<1x128x128xf32> to vector<128x128xf32>
    %cst_36 = arith.constant 2.000000e-01 : f32
    %59 = vector.broadcast %cst_36 : f32 to vector<128x128xf32>
    %60 = arith.mulf %59, %56 : vector<128x128xf32>
    %61 = arith.addf %58, %60 : vector<128x128xf32>
    %c0_37 = arith.constant 0 : index
    %c0_38 = arith.constant 0 : index
    %c0_39 = arith.constant 0 : index
    %62 = vector.load %arg10[%c0_37, %c0_38, %c0_39] : memref<1x128x128xf32, #tpu.memory_space<vmem>>, vector<1x128x128xf32>
    %63 = vector.shape_cast %62 : vector<1x128x128xf32> to vector<128x128xf32>
    %64 = vector.shape_cast %61 : vector<128x128xf32> to vector<1x128x128xf32>
    tpu.vector_store %arg10[%c0_37, %c0_38, %c0_39], %64 {strides = array<i32>} : memref<1x128x128xf32, #tpu.memory_space<vmem>>, vector<1x128x128xf32>,
    %65 = arith.truncf %56 : vector<128x128xf32> to vector<128x128xbf16>
    %cst_40 = arith.constant dense<0.000000e+00> : vector<128x128xf32>
    %66 = tpu.matmul %1, %65, %cst_40 {dimension_numbers = #tpu.dot_dimension_numbers<[1], [0], [0], [1], [0, 0, 1, 1], [], []>} : vector<128x128xbf16>, vector<128x128xbf16>, vector<128x128xf32> -> vector<128x128xf32>
    %c0_41 = arith.constant 0 : index
    %c0_42 = arith.constant 0 : index
    %c0_43 = arith.constant 0 : index
    %67 = vector.load %arg7[%c0_41, %c0_42, %c0_43] : memref<1x128x128xf32, #tpu.memory_space<vmem>>, vector<1x128x128xf32>
    %68 = vector.shape_cast %67 : vector<1x128x128xf32> to vector<128x128xf32>
    %cst_44 = arith.constant dense<0.000000e+00> : vector<128x128xf32>
    %69 = tpu.matmul %66, %68, %cst_44 {dimension_numbers = #tpu.dot_dimension_numbers<[1], [0], [0], [1], [0, 0, 1, 1], [], []>} : vector<128x128xf32>, vector<128x128xf32>, vector<128x128xf32> -> vector<128x128xf32>
    %c0_45 = arith.constant 0 : index
    %c0_46 = arith.constant 0 : index
    %c0_47 = arith.constant 0 : index
    %70 = vector.load %arg8[%c0_45, %c0_46, %c0_47] : memref<1x128x128xf32, #tpu.memory_space<vmem>>, vector<1x128x128xf32>
    %71 = vector.shape_cast %70 : vector<1x128x128xf32> to vector<128x128xf32>
    %cst_48 = arith.constant dense<0.000000e+00> : vector<128x128xf32>
    %72 = tpu.matmul %56, %71, %cst_48 {dimension_numbers = #tpu.dot_dimension_numbers<[1], [0], [0], [1], [0, 0, 1, 1], [], []>} : vector<128x128xf32>, vector<128x128xf32>, vector<128x128xf32> -> vector<128x128xf32>
    %73 = arith.addf %69, %72 : vector<128x128xf32>
    %74 = vector.extract_strided_slice %3 {offsets = [6, 0], sizes = [1, 128], strides = [1, 1]} : vector<16x128xf32> to vector<1x128xf32>
    %75 = vector.extract_strided_slice %3 {offsets = [7, 0], sizes = [1, 128], strides = [1, 1]} : vector<16x128xf32> to vector<1x128xf32>
    %76 = vector.extract_strided_slice %3 {offsets = [8, 0], sizes = [1, 128], strides = [1, 1]} : vector<16x128xf32> to vector<1x128xf32>
    %77 = vector.broadcast %74 : vector<1x128xf32> to vector<128x128xf32>
    %78 = arith.addf %73, %77 : vector<128x128xf32>
    %cst_49 = arith.constant 0.000000e+00 : f32
    %79 = vector.broadcast %cst_49 : f32 to vector<128x128xf32>
    %80 = arith.cmpf oge, %78, %79 : vector<128x128xf32>
    %cst_50 = arith.constant 0.00999999977 : f32
    %81 = vector.broadcast %cst_50 : f32 to vector<128x128xf32>
    %82 = arith.mulf %81, %78 : vector<128x128xf32>
    %83 = arith.select %80, %78, %82 : vector<128x128xi1>, vector<128x128xf32>
    %84 = vector.broadcast %75 : vector<1x128xf32> to vector<128x128xf32>
    %85 = arith.mulf %83, %84 : vector<128x128xf32>
    %86 = vector.broadcast %76 : vector<1x128xf32> to vector<128x128xf32>
    %87 = arith.addf %85, %86 : vector<128x128xf32>
    %c0_51 = arith.constant 0 : index
    %c0_52 = arith.constant 0 : index
    %c0_53 = arith.constant 0 : index
    %88 = vector.load %arg10[%c0_51, %c0_52, %c0_53] : memref<1x128x128xf32, #tpu.memory_space<vmem>>, vector<1x128x128xf32>
    %89 = vector.shape_cast %88 : vector<1x128x128xf32> to vector<128x128xf32>
    %cst_54 = arith.constant 1.000000e-01 : f32
    %90 = vector.broadcast %cst_54 : f32 to vector<128x128xf32>
    %91 = arith.mulf %90, %87 : vector<128x128xf32>
    %92 = arith.addf %89, %91 : vector<128x128xf32>
    %c0_55 = arith.constant 0 : index
    %c0_56 = arith.constant 0 : index
    %c0_57 = arith.constant 0 : index
    %93 = vector.load %arg10[%c0_55, %c0_56, %c0_57] : memref<1x128x128xf32, #tpu.memory_space<vmem>>, vector<1x128x128xf32>
    %94 = vector.shape_cast %93 : vector<1x128x128xf32> to vector<128x128xf32>
    %95 = vector.shape_cast %92 : vector<128x128xf32> to vector<1x128x128xf32>
    tpu.vector_store %arg10[%c0_55, %c0_56, %c0_57], %95 {strides = array<i32>} : memref<1x128x128xf32, #tpu.memory_space<vmem>>, vector<1x128x128xf32>,
    return
  }
  func.func @transform_0(%arg0: i32) -> (i32, i32, i32) {
    %c0_i32 = arith.constant 0 : i32
    %c0_i32_0 = arith.constant 0 : i32
    %c0_i32_1 = arith.constant 0 : i32
    return %arg0, %c0_i32, %c0_i32_0 : i32, i32, i32
  }
  func.func @transform_1(%arg0: i32) -> (i32, i32, i32) {
    %c0_i32 = arith.constant 0 : i32
    %c0_i32_0 = arith.constant 0 : i32
    %c0_i32_1 = arith.constant 0 : i32
    return %arg0, %c0_i32, %c0_i32_0 : i32, i32, i32
  }
  func.func @transform_2(%arg0: i32) -> (i32, i32, i32) {
    %c0_i32 = arith.constant 0 : i32
    %c0_i32_0 = arith.constant 0 : i32
    %c0_i32_1 = arith.constant 0 : i32
    return %arg0, %c0_i32, %c0_i32_0 : i32, i32, i32
  }
  func.func @transform_3(%arg0: i32) -> (i32, i32, i32) {
    %c0_i32 = arith.constant 0 : i32
    %c0_i32_0 = arith.constant 0 : i32
    %c0_i32_1 = arith.constant 0 : i32
    return %arg0, %c0_i32, %c0_i32_0 : i32, i32, i32
  }
  func.func @transform_4(%arg0: i32) -> (i32, i32, i32) {
    %c0_i32 = arith.constant 0 : i32
    %c0_i32_0 = arith.constant 0 : i32
    %c0_i32_1 = arith.constant 0 : i32
    return %arg0, %c0_i32, %c0_i32_0 : i32, i32, i32
  }
  func.func @transform_5(%arg0: i32) -> (i32, i32, i32) {
    %c0_i32 = arith.constant 0 : i32
    %c0_i32_0 = arith.constant 0 : i32
    %c0_i32_1 = arith.constant 0 : i32
    return %arg0, %c0_i32, %c0_i32_0 : i32, i32, i32
  }
  func.func @transform_6(%arg0: i32) -> (i32, i32, i32) {
    %c0_i32 = arith.constant 0 : i32
    %c0_i32_0 = arith.constant 0 : i32
    %c0_i32_1 = arith.constant 0 : i32
    return %arg0, %c0_i32, %c0_i32_0 : i32, i32, i32
  }
  func.func @transform_7(%arg0: i32) -> (i32, i32, i32) {
    %c0_i32 = arith.constant 0 : i32
    %c0_i32_0 = arith.constant 0 : i32
    %c0_i32_1 = arith.constant 0 : i32
    return %arg0, %c0_i32, %c0_i32_0 : i32, i32, i32
  }
  func.func @transform_8(%arg0: i32) -> (i32, i32, i32) {
    %c0_i32 = arith.constant 0 : i32
    %c0_i32_0 = arith.constant 0 : i32
    %c0_i32_1 = arith.constant 0 : i32
    return %arg0, %c0_i32, %c0_i32_0 : i32, i32, i32
  }
  func.func @transform_9(%arg0: i32) -> (i32, i32, i32) {
    %c0_i32 = arith.constant 0 : i32
    %c0_i32_0 = arith.constant 0 : i32
    %c0_i32_1 = arith.constant 0 : i32
    return %arg0, %c0_i32, %c0_i32_0 : i32, i32, i32
  }
}

</mosaic_0001>

<llo_original>
// kernel: tpu_custom_call.1
$region0: #{tpu_custom_call.1}
  #allocation0 [shape = 'u32[]', space=smem, size = 0x4, offset = 0x4, fixed_abs, tag = 'smem constant byte address 0x4 - core index']
  #allocation1 [shape = 'u32[144,128]{1,0:T(1,128)}', space=vmem, size = 0x12000, scoped, tag = 'internal scratch']
  %s0 = inlined_call_operand.hbm [shape: f32[2,128,128], index: 0, kind: input, shape index: {}]
  %s1 = inlined_call_operand.hbm [shape: bf16[2,128,128], index: 1, kind: input, shape index: {}]
  %s2 = inlined_call_operand.hbm [shape: f32[2,128,128], index: 2, kind: input, shape index: {}]
  %s3 = inlined_call_operand.hbm [shape: f32[2,128,128], index: 3, kind: input, shape index: {}]
  %s4 = inlined_call_operand.hbm [shape: f32[2,128,128], index: 4, kind: input, shape index: {}]
  %s5 = inlined_call_operand.hbm [shape: f32[2,128,128], index: 5, kind: input, shape index: {}]
  %s6 = inlined_call_operand.hbm [shape: f32[2,128,128], index: 6, kind: input, shape index: {}]
  %s7 = inlined_call_operand.hbm [shape: f32[2,128,128], index: 7, kind: input, shape index: {}]
  %s8 = inlined_call_operand.hbm [shape: f32[2,16,128], index: 8, kind: input, shape index: {}]
  %s9 = inlined_call_operand.hbm [shape: f32[2,128,128], index: 9, kind: output, shape index: {}]
  %s10 = sld [smem:[#allocation0]]
  $region105: #{tpu_custom_call.1} parent=0
    _
  %s12 = ssub.s32 1, %s10
  %s13 = scalar_select 0, %s12, %s10
  $region1: #{tpu_custom_call.1} parent=0
    #allocation2 [shape = 'u8[131072]{0}', space=vmem, size = 0x20000, scoped, tag = 'input window, operand 0']
    #allocation3 [shape = 's32[2]{0}', space=sflag, size = 0x8, scoped, tag = 'scoped memory for tpu_custom_call.1']
    #allocation4 [shape = 's32[2]{0}', space=sflag, size = 0x8, scoped, tag = 'scoped memory for tpu_custom_call.1']
    #allocation5 [shape = 'u8[65536]{0}', space=vmem, size = 0x10000, scoped, tag = 'input window, operand 1']
    #allocation6 [shape = 's32[2]{0}', space=sflag, size = 0x8, scoped, tag = 'scoped memory for tpu_custom_call.1']
    #allocation7 [shape = 'u8[131072]{0}', space=vmem, size = 0x20000, scoped, tag = 'input window, operand 2']
    #allocation8 [shape = 'u8[131072]{0}', space=vmem, size = 0x20000, scoped, tag = 'input window, operand 3']
    #allocation9 [shape = 's32[2]{0}', space=sflag, size = 0x8, scoped, tag = 'scoped memory for tpu_custom_call.1']
    #allocation10 [shape = 'u8[131072]{0}', space=vmem, size = 0x20000, scoped, tag = 'input window, operand 4']
    #allocation11 [shape = 'u8[131072]{0}', space=vmem, size = 0x20000, scoped, tag = 'input window, operand 5']
    #allocation12 [shape = 's32[2]{0}', space=sflag, size = 0x8, scoped, tag = 'scoped memory for tpu_custom_call.1']
    #allocation13 [shape = 'u8[131072]{0}', space=vmem, size = 0x20000, scoped, tag = 'input window, operand 6']
    #allocation14 [shape = 'u8[131072]{0}', space=vmem, size = 0x20000, scoped, tag = 'input window, operand 7']
    #allocation15 [shape = 's32[2]{0}', space=sflag, size = 0x8, scoped, tag = 'scoped memory for tpu_custom_call.1']
    #allocation16 [shape = 'u8[16384]{0}', space=vmem, size = 0x4000, scoped, tag = 'input window, operand 8']
    #allocation17 [shape = 'u8[131072]{0}', space=vmem, size = 0x20000, scoped, tag = 'output window, operand 0']
    %14 = vsyncpa [#allocation3], 0
    %s15 = scalar_lea.sflag [#allocation3], 1
    %16 = vsyncpa %s15, 0
    %17 = vsyncpa [#allocation6], 0
    %s18 = scalar_lea.sflag [#allocation6], 1
    %19 = vsyncpa %s18, 0
    %20 = vsyncpa [#allocation9], 0
    %s21 = scalar_lea.sflag [#allocation9], 1
    %22 = vsyncpa %s21, 0
    %23 = vsyncpa [#allocation12], 0
    %s24 = scalar_lea.sflag [#allocation12], 1
    %25 = vsyncpa %s24, 0
    %26 = vsyncpa [#allocation15], 0
    %s27 = scalar_lea.sflag [#allocation15], 1
    %28 = vsyncpa %s27, 0
    %29 = vsyncpa [#allocation4], 0
    %s30 = scalar_lea.sflag [#allocation4], 1
    %31 = vsyncpa %s30, 0
    loop: start=0, step=1, limit=4
    $region2: #{tpu_custom_call.1} parent=1 // loop_pre_header
      _
    $region3: #{tpu_custom_call.1} parent=1 // loop_header
      %s33 = sphi 0, %s37
      %p34 = scmp.ge.s32.totalorder %s33, 4
      %s43 = sphi 0, %s45
      %s46 = sphi 0, %s43
      %s47 = sphi 0, %s46
      %s63 = sphi 0, %s47
      %s69 = sphi 0, %s71
      %s72 = sphi 0, %s69
      %s73 = sphi 0, %s72
      %s89 = sphi 0, %s73
      %s95 = sphi 0, %s97
      %s98 = sphi 0, %s95
      %s99 = sphi 0, %s98
      %s115 = sphi 0, %s99
      %s121 = sphi 0, %s123
      %s124 = sphi 0, %s121
      %s125 = sphi 0, %s124
      %s141 = sphi 0, %s125
      %s147 = sphi 0, %s149
      %s150 = sphi 0, %s147
      %s151 = sphi 0, %s150
      %s167 = sphi 0, %s151
      %s173 = sphi 0, %s175
      %s176 = sphi 0, %s173
      %s177 = sphi 0, %s176
      %s193 = sphi 0, %s177
      %s199 = sphi 0, %s201
      %s202 = sphi 0, %s199
      %s203 = sphi 0, %s202
      %s219 = sphi 0, %s203
      %s225 = sphi 0, %s227
      %s228 = sphi 0, %s225
      %s229 = sphi 0, %s228
      %s245 = sphi 0, %s229
      %s251 = sphi 0, %s253
      %s254 = sphi 0, %s251
      %s255 = sphi 0, %s254
      %s271 = sphi 0, %s255
      %s277 = sphi 0, %s279
      %s280 = sphi 0, %s277
      %s281 = sphi 0, %s280
      %s297 = sphi 0, %s281
    $region4: #{tpu_custom_call.1} parent=1 // loop_header_branch
      %36 = sbr.rel (%p34) target = $region8
    $region5: #{tpu_custom_call.1} parent=1 // loop_body
      %s38 = ssub.s32 %s33, 1
      %s39 = ssub.s32 %s33, 2
      %s40 = sadd.s32 %s33, 1
      %s41 = ssub.s32 %s33, %s40
      %p42 = scmp.eq.s32.totalorder %s41, 0
      %s44 = sadd.s32 %s43, 1
      %s45 = scalar_select %p42, %s43, %s44
      %p48 = pneg %p42
      %p49 = scmp.eq.s32.totalorder %s33, 1
      %p50 = por %p48, %p49
      %p51 = scmp.ne.s32.totalorder %s43, %s46
      %p52 = scmp.eq.s32.totalorder %s33, 0
      %p53 = por %p51, %p52
      %p54 = scmp.ne.s32.totalorder %s43, %s46
      %p55 = scmp.eq.s32.totalorder %s38, 1
      %p56 = por %p54, %p55
      %p57 = scmp.ne.s32.totalorder %s46, %s47
      %p58 = scmp.eq.s32.totalorder %s38, 0
      %p59 = por %p57, %p58
      %p60 = scmp.ne.s32.totalorder %s46, %s47
      %p61 = scmp.eq.s32.totalorder %s39, 1
      %p62 = por %p60, %p61
      %p64 = scmp.ne.s32.totalorder %s47, %s63
      %p65 = scmp.eq.s32.totalorder %s39, 0
      %p66 = por %p64, %p65
      %s67 = ssub.s32 %s33, %s40
      %p68 = scmp.eq.s32.totalorder %s67, 0
      %s70 = sadd.s32 %s69, 1
      %s71 = scalar_select %p68, %s69, %s70
      %p74 = pneg %p68
      %p75 = scmp.eq.s32.totalorder %s33, 1
      %p76 = por %p74, %p75
      %p77 = scmp.ne.s32.totalorder %s69, %s72
      %p78 = scmp.eq.s32.totalorder %s33, 0
      %p79 = por %p77, %p78
      %p80 = scmp.ne.s32.totalorder %s69, %s72
      %p81 = scmp.eq.s32.totalorder %s38, 1
      %p82 = por %p80, %p81
      %p83 = scmp.ne.s32.totalorder %s72, %s73
      %p84 = scmp.eq.s32.totalorder %s38, 0
      %p85 = por %p83, %p84
      %p86 = scmp.ne.s32.totalorder %s72, %s73
      %p87 = scmp.eq.s32.totalorder %s39, 1
      %p88 = por %p86, %p87
      %p90 = scmp.ne.s32.totalorder %s73, %s89
      %p91 = scmp.eq.s32.totalorder %s39, 0
      %p92 = por %p90, %p91
      %s93 = ssub.s32 %s33, %s40
      %p94 = scmp.eq.s32.totalorder %s93, 0
      %s96 = sadd.s32 %s95, 1
      %s97 = scalar_select %p94, %s95, %s96
      %p100 = pneg %p94
      %p101 = scmp.eq.s32.totalorder %s33, 1
      %p102 = por %p100, %p101
      %p103 = scmp.ne.s32.totalorder %s95, %s98
      %p104 = scmp.eq.s32.totalorder %s33, 0
      %p105 = por %p103, %p104
      %p106 = scmp.ne.s32.totalorder %s95, %s98
      %p107 = scmp.eq.s32.totalorder %s38, 1
      %p108 = por %p106, %p107
      %p109 = scmp.ne.s32.totalorder %s98, %s99
      %p110 = scmp.eq.s32.totalorder %s38, 0
      %p111 = por %p109, %p110
      %p112 = scmp.ne.s32.totalorder %s98, %s99
      %p113 = scmp.eq.s32.totalorder %s39, 1
      %p114 = por %p112, %p113
      %p116 = scmp.ne.s32.totalorder %s99, %s115
      %p117 = scmp.eq.s32.totalorder %s39, 0
      %p118 = por %p116, %p117
      %s119 = ssub.s32 %s33, %s40
      %p120 = scmp.eq.s32.totalorder %s119, 0
      %s122 = sadd.s32 %s121, 1
      %s123 = scalar_select %p120, %s121, %s122
      %p126 = pneg %p120
      %p127 = scmp.eq.s32.totalorder %s33, 1
      %p128 = por %p126, %p127
      %p129 = scmp.ne.s32.totalorder %s121, %s124
      %p130 = scmp.eq.s32.totalorder %s33, 0
      %p131 = por %p129, %p130
      %p132 = scmp.ne.s32.totalorder %s121, %s124
      %p133 = scmp.eq.s32.totalorder %s38, 1
      %p134 = por %p132, %p133
      %p135 = scmp.ne.s32.totalorder %s124, %s125
      %p136 = scmp.eq.s32.totalorder %s38, 0
      %p137 = por %p135, %p136
      %p138 = scmp.ne.s32.totalorder %s124, %s125
      %p139 = scmp.eq.s32.totalorder %s39, 1
      %p140 = por %p138, %p139
      %p142 = scmp.ne.s32.totalorder %s125, %s141
      %p143 = scmp.eq.s32.totalorder %s39, 0
      %p144 = por %p142, %p143
      %s145 = ssub.s32 %s33, %s40
      %p146 = scmp.eq.s32.totalorder %s145, 0
      %s148 = sadd.s32 %s147, 1
      %s149 = scalar_select %p146, %s147, %s148
      %p152 = pneg %p146
      %p153 = scmp.eq.s32.totalorder %s33, 1
      %p154 = por %p152, %p153
      %p155 = scmp.ne.s32.totalorder %s147, %s150
      %p156 = scmp.eq.s32.totalorder %s33, 0
      %p157 = por %p155, %p156
      %p158 = scmp.ne.s32.totalorder %s147, %s150
      %p159 = scmp.eq.s32.totalorder %s38, 1
      %p160 = por %p158, %p159
      %p161 = scmp.ne.s32.totalorder %s150, %s151
      %p162 = scmp.eq.s32.totalorder %s38, 0
      %p163 = por %p161, %p162
      %p164 = scmp.ne.s32.totalorder %s150, %s151
      %p165 = scmp.eq.s32.totalorder %s39, 1
      %p166 = por %p164, %p165
      %p168 = scmp.ne.s32.totalorder %s151, %s167
      %p169 = scmp.eq.s32.totalorder %s39, 0
      %p170 = por %p168, %p169
      %s171 = ssub.s32 %s33, %s40
      %p172 = scmp.eq.s32.totalorder %s171, 0
      %s174 = sadd.s32 %s173, 1
      %s175 = scalar_select %p172, %s173, %s174
      %p178 = pneg %p172
      %p179 = scmp.eq.s32.totalorder %s33, 1
      %p180 = por %p178, %p179
      %p181 = scmp.ne.s32.totalorder %s173, %s176
      %p182 = scmp.eq.s32.totalorder %s33, 0
      %p183 = por %p181, %p182
      %p184 = scmp.ne.s32.totalorder %s173, %s176
      %p185 = scmp.eq.s32.totalorder %s38, 1
      %p186 = por %p184, %p185
      %p187 = scmp.ne.s32.totalorder %s176, %s177
      %p188 = scmp.eq.s32.totalorder %s38, 0
      %p189 = por %p187, %p188
      %p190 = scmp.ne.s32.totalorder %s176, %s177
      %p191 = scmp.eq.s32.totalorder %s39, 1
      %p192 = por %p190, %p191
      %p194 = scmp.ne.s32.totalorder %s177, %s193
      %p195 = scmp.eq.s32.totalorder %s39, 0
      %p196 = por %p194, %p195
      %s197 = ssub.s32 %s33, %s40
      %p198 = scmp.eq.s32.totalorder %s197, 0
      %s200 = sadd.s32 %s199, 1
      %s201 = scalar_select %p198, %s199, %s200
      %p204 = pneg %p198
      %p205 = scmp.eq.s32.totalorder %s33, 1
      %p206 = por %p204, %p205
      %p207 = scmp.ne.s32.totalorder %s199, %s202
      %p208 = scmp.eq.s32.totalorder %s33, 0
      %p209 = por %p207, %p208
      %p210 = scmp.ne.s32.totalorder %s199, %s202
      %p211 = scmp.eq.s32.totalorder %s38, 1
      %p212 = por %p210, %p211
      %p213 = scmp.ne.s32.totalorder %s202, %s203
      %p214 = scmp.eq.s32.totalorder %s38, 0
      %p215 = por %p213, %p214
      %p216 = scmp.ne.s32.totalorder %s202, %s203
      %p217 = scmp.eq.s32.totalorder %s39, 1
      %p218 = por %p216, %p217
      %p220 = scmp.ne.s32.totalorder %s203, %s219
      %p221 = scmp.eq.s32.totalorder %s39, 0
      %p222 = por %p220, %p221
      %s223 = ssub.s32 %s33, %s40
      %p224 = scmp.eq.s32.totalorder %s223, 0
      %s226 = sadd.s32 %s225, 1
      %s227 = scalar_select %p224, %s225, %s226
      %p230 = pneg %p224
      %p231 = scmp.eq.s32.totalorder %s33, 1
      %p232 = por %p230, %p231
      %p233 = scmp.ne.s32.totalorder %s225, %s228
      %p234 = scmp.eq.s32.totalorder %s33, 0
      %p235 = por %p233, %p234
      %p236 = scmp.ne.s32.totalorder %s225, %s228
      %p237 = scmp.eq.s32.totalorder %s38, 1
      %p238 = por %p236, %p237
      %p239 = scmp.ne.s32.totalorder %s228, %s229
      %p240 = scmp.eq.s32.totalorder %s38, 0
      %p241 = por %p239, %p240
      %p242 = scmp.ne.s32.totalorder %s228, %s229
      %p243 = scmp.eq.s32.totalorder %s39, 1
      %p244 = por %p242, %p243
      %p246 = scmp.ne.s32.totalorder %s229, %s245
      %p247 = scmp.eq.s32.totalorder %s39, 0
      %p248 = por %p246, %p247
      %s249 = ssub.s32 %s33, %s40
      %p250 = scmp.eq.s32.totalorder %s249, 0
      %s252 = sadd.s32 %s251, 1
      %s253 = scalar_select %p250, %s251, %s252
      %p256 = pneg %p250
      %p257 = scmp.eq.s32.totalorder %s33, 1
      %p258 = por %p256, %p257
      %p259 = scmp.ne.s32.totalorder %s251, %s254
      %p260 = scmp.eq.s32.totalorder %s33, 0
      %p261 = por %p259, %p260
      %p262 = scmp.ne.s32.totalorder %s251, %s254
      %p263 = scmp.eq.s32.totalorder %s38, 1
      %p264 = por %p262, %p263
      %p265 = scmp.ne.s32.totalorder %s254, %s255
      %p266 = scmp.eq.s32.totalorder %s38, 0
      %p267 = por %p265, %p266
      %p268 = scmp.ne.s32.totalorder %s254, %s255
      %p269 = scmp.eq.s32.totalorder %s39, 1
      %p270 = por %p268, %p269
      %p272 = scmp.ne.s32.totalorder %s255, %s271
      %p273 = scmp.eq.s32.totalorder %s39, 0
      %p274 = por %p272, %p273
      %s275 = ssub.s32 %s33, %s40
      %p276 = scmp.eq.s32.totalorder %s275, 0
      %s278 = sadd.s32 %s277, 1
      %s279 = scalar_select %p276, %s277, %s278
      %p282 = pneg %p276
      %p283 = scmp.eq.s32.totalorder %s33, 1
      %p284 = por %p282, %p283
      %p285 = scmp.ne.s32.totalorder %s277, %s280
      %p286 = scmp.eq.s32.totalorder %s33, 0
      %p287 = por %p285, %p286
      %p288 = scmp.ne.s32.totalorder %s277, %s280
      %p289 = scmp.eq.s32.totalorder %s38, 1
      %p290 = por %p288, %p289
      %p291 = scmp.ne.s32.totalorder %s280, %s281
      %p292 = scmp.eq.s32.totalorder %s38, 0
      %p293 = por %p291, %p292
      %p294 = scmp.ne.s32.totalorder %s280, %s281
      %p295 = scmp.eq.s32.totalorder %s39, 1
      %p296 = por %p294, %p295
      %p298 = scmp.ne.s32.totalorder %s281, %s297
      %p299 = scmp.eq.s32.totalorder %s39, 0
      %p300 = por %p298, %p299
      %p301 = scmp.le.s32.totalorder 1, %s33
      %p302 = scmp.lt.s32.totalorder %s33, 3
      %p303 = pnand %p301, %p302
      %p304 = pneg %p303
      // Predicated region
      $region9: #{tpu_custom_call.1} parent=5 // pred_check
        _
      $region10: #{tpu_custom_call.1} parent=5 // pred_check_branch
        %306 = sbr.rel (%p303) target = $region12
      $region11: #{tpu_custom_call.1} parent=5 // pred_region
        %s307 = ssub.s32 %s33, 1
      $region12: #{tpu_custom_call.1} parent=5 // pred_fallthru
        _
      %p308 = scmp.lt.s32.totalorder %s33, 2
      // Predicated region
      $region13: #{tpu_custom_call.1} parent=5 // pred_check
        %p309 = pneg %p308
      $region14: #{tpu_custom_call.1} parent=5 // pred_check_branch
        %311 = sbr.rel (%p309) target = $region16
      $region15: #{tpu_custom_call.1} parent=5 // pred_region
        // Predicated region
        $region17: #{tpu_custom_call.1} parent=15 // pred_check
          %p312 = pneg %p53
        $region18: #{tpu_custom_call.1} parent=15 // pred_check_branch
          %314 = sbr.rel (%p312) target = $region20
        $region19: #{tpu_custom_call.1} parent=15 // pred_region
          %s315 = sand.u32 %s43, 1
          %s316 = scalar_lea.sflag [#allocation3], %s315
          %s317 = sand.u32 %s43, 1
          %s318 = smul.addr %s317, 128
          %s319 = scalar_lea.vmem [#allocation2], %s318
          %s321 = ssub.s32 2048, 2048
          %322 = vsyncadd %s316, %s321
          %s323 = smul.addr %s33, 16
          %s324 = smul.addr %s323, 128
          %s325 = scalar_lea.hbm %s0, %s324
          %s326 = sshll.u32 %s319, 4
          %s327 = int_to_ptr.vmem [resolvable:$true] %s326
          %332 = dma.hbm_to_vmem [thread:$0]  %s325, 2048, %s327, %s316, 128, 128, 8
        $region20: #{tpu_custom_call.1} parent=15 // pred_fallthru
          _
        // Predicated region
        $region21: #{tpu_custom_call.1} parent=15 // pred_check
          %p333 = pneg %p79
        $region22: #{tpu_custom_call.1} parent=15 // pred_check_branch
          %335 = sbr.rel (%p333) target = $region24
        $region23: #{tpu_custom_call.1} parent=15 // pred_region
          %s336 = sand.u32 %s33, 1
          %s337 = scalar_lea.sflag [#allocation6], %s336
          %s338 = sand.u32 %s69, 1
          %s339 = smul.addr %s338, 64
          %s340 = scalar_lea.vmem [#allocation5], %s339
          %s342 = ssub.s32 1024, 1024
          %343 = vsyncadd %s337, %s342
          %s344 = smul.addr %s33, 16
          %s345 = smul.addr %s344, 64
          %s346 = scalar_lea.hbm %s1, %s345
          %s347 = sshll.u32 %s340, 4
          %s348 = int_to_ptr.vmem [resolvable:$true] %s347
          %353 = dma.hbm_to_vmem [thread:$0]  %s346, 1024, %s348, %s337, 64, 64, 4
        $region24: #{tpu_custom_call.1} parent=15 // pred_fallthru
          _
        // Predicated region
        $region25: #{tpu_custom_call.1} parent=15 // pred_check
          %p354 = pneg %p105
        $region26: #{tpu_custom_call.1} parent=15 // pred_check_branch
          %356 = sbr.rel (%p354) target = $region28
        $region27: #{tpu_custom_call.1} parent=15 // pred_region
          %s357 = sand.u32 %s33, 1
          %s358 = scalar_lea.sflag [#allocation6], %s357
          %s359 = sand.u32 %s95, 1
          %s360 = smul.addr %s359, 128
          %s361 = scalar_lea.vmem [#allocation7], %s360
          %s363 = ssub.s32 2048, 2048
          %364 = vsyncadd %s358, %s363
          %s365 = smul.addr %s33, 16
          %s366 = smul.addr %s365, 128
          %s367 = scalar_lea.hbm %s2, %s366
          %s368 = sshll.u32 %s361, 4
          %s369 = int_to_ptr.vmem [resolvable:$true] %s368
          %374 = dma.hbm_to_vmem [thread:$0]  %s367, 2048, %s369, %s358, 128, 128, 8
        $region28: #{tpu_custom_call.1} parent=15 // pred_fallthru
          _
        // Predicated region
        $region29: #{tpu_custom_call.1} parent=15 // pred_check
          %p375 = pneg %p131
        $region30: #{tpu_custom_call.1} parent=15 // pred_check_branch
          %377 = sbr.rel (%p375) target = $region32
        $region31: #{tpu_custom_call.1} parent=15 // pred_region
          %s378 = sand.u32 %s33, 1
          %s379 = scalar_lea.sflag [#allocation9], %s378
          %s380 = sand.u32 %s121, 1
          %s381 = smul.addr %s380, 128
          %s382 = scalar_lea.vmem [#allocation8], %s381
          %s384 = ssub.s32 2048, 2048
          %385 = vsyncadd %s379, %s384
          %s386 = smul.addr %s33, 16
          %s387 = smul.addr %s386, 128
          %s388 = scalar_lea.hbm %s3, %s387
          %s389 = sshll.u32 %s382, 4
          %s390 = int_to_ptr.vmem [resolvable:$true] %s389
          %395 = dma.hbm_to_vmem [thread:$0]  %s388, 2048, %s390, %s379, 128, 128, 8
        $region32: #{tpu_custom_call.1} parent=15 // pred_fallthru
          _
        // Predicated region
        $region33: #{tpu_custom_call.1} parent=15 // pred_check
          %p396 = pneg %p157
        $region34: #{tpu_custom_call.1} parent=15 // pred_check_branch
          %398 = sbr.rel (%p396) target = $region36
        $region35: #{tpu_custom_call.1} parent=15 // pred_region
          %s399 = sand.u32 %s33, 1
          %s400 = scalar_lea.sflag [#allocation9], %s399
          %s401 = sand.u32 %s147, 1
          %s402 = smul.addr %s401, 128
          %s403 = scalar_lea.vmem [#allocation10], %s402
          %s405 = ssub.s32 2048, 2048
          %406 = vsyncadd %s400, %s405
          %s407 = smul.addr %s33, 16
          %s408 = smul.addr %s407, 128
          %s409 = scalar_lea.hbm %s4, %s408
          %s410 = sshll.u32 %s403, 4
          %s411 = int_to_ptr.vmem [resolvable:$true] %s410
          %416 = dma.hbm_to_vmem [thread:$0]  %s409, 2048, %s411, %s400, 128, 128, 8
        $region36: #{tpu_custom_call.1} parent=15 // pred_fallthru
          _
        // Predicated region
        $region37: #{tpu_custom_call.1} parent=15 // pred_check
          %p417 = pneg %p183
        $region38: #{tpu_custom_call.1} parent=15 // pred_check_branch
          %419 = sbr.rel (%p417) target = $region40
        $region39: #{tpu_custom_call.1} parent=15 // pred_region
          %s420 = sand.u32 %s33, 1
          %s421 = scalar_lea.sflag [#allocation12], %s420
          %s422 = sand.u32 %s173, 1
          %s423 = smul.addr %s422, 128
          %s424 = scalar_lea.vmem [#allocation11], %s423
          %s426 = ssub.s32 2048, 2048
          %427 = vsyncadd %s421, %s426
          %s428 = smul.addr %s33, 16
          %s429 = smul.addr %s428, 128
          %s430 = scalar_lea.hbm %s5, %s429
          %s431 = sshll.u32 %s424, 4
          %s432 = int_to_ptr.vmem [resolvable:$true] %s431
          %437 = dma.hbm_to_vmem [thread:$0]  %s430, 2048, %s432, %s421, 128, 128, 8
        $region40: #{tpu_custom_call.1} parent=15 // pred_fallthru
          _
        // Predicated region
        $region41: #{tpu_custom_call.1} parent=15 // pred_check
          %p438 = pneg %p209
        $region42: #{tpu_custom_call.1} parent=15 // pred_check_branch
          %440 = sbr.rel (%p438) target = $region44
        $region43: #{tpu_custom_call.1} parent=15 // pred_region
          %s441 = sand.u32 %s33, 1
          %s442 = scalar_lea.sflag [#allocation12], %s441
          %s443 = sand.u32 %s199, 1
          %s444 = smul.addr %s443, 128
          %s445 = scalar_lea.vmem [#allocation13], %s444
          %s447 = ssub.s32 2048, 2048
          %448 = vsyncadd %s442, %s447
          %s449 = smul.addr %s33, 16
          %s450 = smul.addr %s449, 128
          %s451 = scalar_lea.hbm %s6, %s450
          %s452 = sshll.u32 %s445, 4
          %s453 = int_to_ptr.vmem [resolvable:$true] %s452
          %458 = dma.hbm_to_vmem [thread:$0]  %s451, 2048, %s453, %s442, 128, 128, 8
        $region44: #{tpu_custom_call.1} parent=15 // pred_fallthru
          _
        // Predicated region
        $region45: #{tpu_custom_call.1} parent=15 // pred_check
          %p459 = pneg %p235
        $region46: #{tpu_custom_call.1} parent=15 // pred_check_branch
          %461 = sbr.rel (%p459) target = $region48
        $region47: #{tpu_custom_call.1} parent=15 // pred_region
          %s462 = sand.u32 %s33, 1
          %s463 = scalar_lea.sflag [#allocation15], %s462
          %s464 = sand.u32 %s225, 1
          %s465 = smul.addr %s464, 128
          %s466 = scalar_lea.vmem [#allocation14], %s465
          %s468 = ssub.s32 2048, 2048
          %469 = vsyncadd %s463, %s468
          %s470 = smul.addr %s33, 16
          %s471 = smul.addr %s470, 128
          %s472 = scalar_lea.hbm %s7, %s471
          %s473 = sshll.u32 %s466, 4
          %s474 = int_to_ptr.vmem [resolvable:$true] %s473
          %479 = dma.hbm_to_vmem [thread:$0]  %s472, 2048, %s474, %s463, 128, 128, 8
        $region48: #{tpu_custom_call.1} parent=15 // pred_fallthru
          _
        // Predicated region
        $region49: #{tpu_custom_call.1} parent=15 // pred_check
          %p480 = pneg %p261
        $region50: #{tpu_custom_call.1} parent=15 // pred_check_branch
          %482 = sbr.rel (%p480) target = $region52
        $region51: #{tpu_custom_call.1} parent=15 // pred_region
          %s483 = sand.u32 %s33, 1
          %s484 = scalar_lea.sflag [#allocation15], %s483
          %s485 = sand.u32 %s251, 1
          %s486 = smul.addr %s485, 16
          %s487 = scalar_lea.vmem [#allocation16], %s486
          %s489 = ssub.s32 256, 256
          %490 = vsyncadd %s484, %s489
          %s491 = smul.addr %s33, 2
          %s492 = smul.addr %s491, 128
          %s493 = scalar_lea.hbm %s8, %s492
          %s494 = sshll.u32 %s487, 4
          %s495 = int_to_ptr.vmem [resolvable:$true] %s494
          %500 = dma.hbm_to_vmem [thread:$0]  %s493, 256, %s495, %s484, 128, 128, 8
        $region52: #{tpu_custom_call.1} parent=15 // pred_fallthru
          _
      $region16: #{tpu_custom_call.1} parent=5 // pred_fallthru
        _
      %p501 = scmp.le.s32.totalorder 1, %s33
      %p502 = scmp.lt.s32.totalorder %s33, 3
      %p503 = pnand %p501, %p502
      %p504 = pneg %p503
      // Predicated region
      $region53: #{tpu_custom_call.1} parent=5 // pred_check
        _
      $region54: #{tpu_custom_call.1} parent=5 // pred_check_branch
        %506 = sbr.rel (%p503) target = $region56
      $region55: #{tpu_custom_call.1} parent=5 // pred_region
        %s507 = ssub.s32 %s33, 1
        %s508 = sand.u32 %s46, 1
        %s509 = scalar_lea.sflag [#allocation3], %s508
        %s510 = sand.u32 %s46, 1
        %s511 = smul.addr %s510, 128
        %s512 = scalar_lea.vmem [#allocation2], %s511
        // Predicated region
        $region57: #{tpu_custom_call.1} parent=55 // pred_check
          %p513 = pneg %p59
        $region58: #{tpu_custom_call.1} parent=55 // pred_check_branch
          %515 = sbr.rel (%p513) target = $region60
        $region59: #{tpu_custom_call.1} parent=55 // pred_region
          %516 = dma.done %s509, 2048
        $region60: #{tpu_custom_call.1} parent=55 // pred_fallthru
          _
        %s517 = sand.u32 %s38, 1
        %s518 = scalar_lea.sflag [#allocation6], %s517
        %s519 = sand.u32 %s72, 1
        %s520 = smul.addr %s519, 64
        %s521 = scalar_lea.vmem [#allocation5], %s520
        // Predicated region
        $region61: #{tpu_custom_call.1} parent=55 // pred_check
          %p522 = pneg %p85
        $region62: #{tpu_custom_call.1} parent=55 // pred_check_branch
          %524 = sbr.rel (%p522) target = $region64
        $region63: #{tpu_custom_call.1} parent=55 // pred_region
          %525 = dma.done %s518, 1024
        $region64: #{tpu_custom_call.1} parent=55 // pred_fallthru
          _
        %s526 = sand.u32 %s38, 1
        %s527 = scalar_lea.sflag [#allocation6], %s526
        %s528 = sand.u32 %s98, 1
        %s529 = smul.addr %s528, 128
        %s530 = scalar_lea.vmem [#allocation7], %s529
        // Predicated region
        $region65: #{tpu_custom_call.1} parent=55 // pred_check
          %p531 = pneg %p111
        $region66: #{tpu_custom_call.1} parent=55 // pred_check_branch
          %533 = sbr.rel (%p531) target = $region68
        $region67: #{tpu_custom_call.1} parent=55 // pred_region
          %534 = dma.done %s527, 2048
        $region68: #{tpu_custom_call.1} parent=55 // pred_fallthru
          _
        %s535 = sand.u32 %s38, 1
        %s536 = scalar_lea.sflag [#allocation9], %s535
        %s537 = sand.u32 %s124, 1
        %s538 = smul.addr %s537, 128
        %s539 = scalar_lea.vmem [#allocation8], %s538
        // Predicated region
        $region69: #{tpu_custom_call.1} parent=55 // pred_check
          %p540 = pneg %p137
        $region70: #{tpu_custom_call.1} parent=55 // pred_check_branch
          %542 = sbr.rel (%p540) target = $region72
        $region71: #{tpu_custom_call.1} parent=55 // pred_region
          %543 = dma.done %s536, 2048
        $region72: #{tpu_custom_call.1} parent=55 // pred_fallthru
          _
        %s544 = sand.u32 %s38, 1
        %s545 = scalar_lea.sflag [#allocation9], %s544
        %s546 = sand.u32 %s150, 1
        %s547 = smul.addr %s546, 128
        %s548 = scalar_lea.vmem [#allocation10], %s547
        // Predicated region
        $region73: #{tpu_custom_call.1} parent=55 // pred_check
          %p549 = pneg %p163
        $region74: #{tpu_custom_call.1} parent=55 // pred_check_branch
          %551 = sbr.rel (%p549) target = $region76
        $region75: #{tpu_custom_call.1} parent=55 // pred_region
          %552 = dma.done %s545, 2048
        $region76: #{tpu_custom_call.1} parent=55 // pred_fallthru
          _
        %s553 = sand.u32 %s38, 1
        %s554 = scalar_lea.sflag [#allocation12], %s553
        %s555 = sand.u32 %s176, 1
        %s556 = smul.addr %s555, 128
        %s557 = scalar_lea.vmem [#allocation11], %s556
        // Predicated region
        $region77: #{tpu_custom_call.1} parent=55 // pred_check
          %p558 = pneg %p189
        $region78: #{tpu_custom_call.1} parent=55 // pred_check_branch
          %560 = sbr.rel (%p558) target = $region80
        $region79: #{tpu_custom_call.1} parent=55 // pred_region
          %561 = dma.done %s554, 2048
        $region80: #{tpu_custom_call.1} parent=55 // pred_fallthru
          _
        %s562 = sand.u32 %s38, 1
        %s563 = scalar_lea.sflag [#allocation12], %s562
        %s564 = sand.u32 %s202, 1
        %s565 = smul.addr %s564, 128
        %s566 = scalar_lea.vmem [#allocation13], %s565
        // Predicated region
        $region81: #{tpu_custom_call.1} parent=55 // pred_check
          %p567 = pneg %p215
        $region82: #{tpu_custom_call.1} parent=55 // pred_check_branch
          %569 = sbr.rel (%p567) target = $region84
        $region83: #{tpu_custom_call.1} parent=55 // pred_region
          %570 = dma.done %s563, 2048
        $region84: #{tpu_custom_call.1} parent=55 // pred_fallthru
          _
        %s571 = sand.u32 %s38, 1
        %s572 = scalar_lea.sflag [#allocation15], %s571
        %s573 = sand.u32 %s228, 1
        %s574 = smul.addr %s573, 128
        %s575 = scalar_lea.vmem [#allocation14], %s574
        // Predicated region
        $region85: #{tpu_custom_call.1} parent=55 // pred_check
          %p576 = pneg %p241
        $region86: #{tpu_custom_call.1} parent=55 // pred_check_branch
          %578 = sbr.rel (%p576) target = $region88
        $region87: #{tpu_custom_call.1} parent=55 // pred_region
          %579 = dma.done %s572, 2048
        $region88: #{tpu_custom_call.1} parent=55 // pred_fallthru
          _
        %s580 = sand.u32 %s38, 1
        %s581 = scalar_lea.sflag [#allocation15], %s580
        %s582 = sand.u32 %s254, 1
        %s583 = smul.addr %s582, 16
        %s584 = scalar_lea.vmem [#allocation16], %s583
        // Predicated region
        $region89: #{tpu_custom_call.1} parent=55 // pred_check
          %p585 = pneg %p267
        $region90: #{tpu_custom_call.1} parent=55 // pred_check_branch
          %587 = sbr.rel (%p585) target = $region92
        $region91: #{tpu_custom_call.1} parent=55 // pred_region
          %588 = dma.done %s581, 256
        $region92: #{tpu_custom_call.1} parent=55 // pred_fallthru
          _
        %s589 = sand.u32 %s46, 1
        %s590 = scalar_lea.sflag [#allocation3], %s589
        %s591 = sand.u32 %s46, 1
        %s592 = smul.addr %s591, 128
        %s593 = scalar_lea.vmem [#allocation2], %s592
        %p594 = pneg %p59
        %p595 = pneg %p56
        %s596 = sand.u32 %s38, 1
        %s597 = scalar_lea.sflag [#allocation6], %s596
        %s598 = sand.u32 %s72, 1
        %s599 = smul.addr %s598, 64
        %s600 = scalar_lea.vmem [#allocation5], %s599
        %p601 = pneg %p85
        %p602 = pneg %p82
        %s603 = sand.u32 %s38, 1
        %s604 = scalar_lea.sflag [#allocation6], %s603
        %s605 = sand.u32 %s98, 1
        %s606 = smul.addr %s605, 128
        %s607 = scalar_lea.vmem [#allocation7], %s606
        %p608 = pneg %p111
        %p609 = pneg %p108
        %s610 = sand.u32 %s38, 1
        %s611 = scalar_lea.sflag [#allocation9], %s610
        %s612 = sand.u32 %s124, 1
        %s613 = smul.addr %s612, 128
        %s614 = scalar_lea.vmem [#allocation8], %s613
        %p615 = pneg %p137
        %p616 = pneg %p134
        %s617 = sand.u32 %s38, 1
        %s618 = scalar_lea.sflag [#allocation9], %s617
        %s619 = sand.u32 %s150, 1
        %s620 = smul.addr %s619, 128
        %s621 = scalar_lea.vmem [#allocation10], %s620
        %p622 = pneg %p163
        %p623 = pneg %p160
        %s624 = sand.u32 %s38, 1
        %s625 = scalar_lea.sflag [#allocation12], %s624
        %s626 = sand.u32 %s176, 1
        %s627 = smul.addr %s626, 128
        %s628 = scalar_lea.vmem [#allocation11], %s627
        %p629 = pneg %p189
        %p630 = pneg %p186
        %s631 = sand.u32 %s38, 1
        %s632 = scalar_lea.sflag [#allocation12], %s631
        %s633 = sand.u32 %s202, 1
        %s634 = smul.addr %s633, 128
        %s635 = scalar_lea.vmem [#allocation13], %s634
        %p636 = pneg %p215
        %p637 = pneg %p212
        %s638 = sand.u32 %s38, 1
        %s639 = scalar_lea.sflag [#allocation15], %s638
        %s640 = sand.u32 %s228, 1
        %s641 = smul.addr %s640, 128
        %s642 = scalar_lea.vmem [#allocation14], %s641
        %p643 = pneg %p241
        %p644 = pneg %p238
        %s645 = sand.u32 %s38, 1
        %s646 = scalar_lea.sflag [#allocation15], %s645
        %s647 = sand.u32 %s254, 1
        %s648 = smul.addr %s647, 16
        %s649 = scalar_lea.vmem [#allocation16], %s648
        %p650 = pneg %p267
        %p651 = pneg %p264
        %p652 = pneg %p293
        %p653 = pneg %p290
        %s654 = sand.u32 %s280, 1
        %s655 = scalar_lea.sflag [#allocation4], %s654
        %s656 = sand.u32 %s280, 1
        %s657 = smul.addr %s656, 128
        %s658 = scalar_lea.vmem [#allocation17], %s657
        %v660 = vld [vmem:[%s521] sm:$0xf]
        %v661 = vld [vmem:[%s521 + $0x4] sm:$0xf]
        %v662 = vld [vmem:[%s521 + $0x8] sm:$0xf]
        %v663 = vld [vmem:[%s521 + $0xc] sm:$0xf]
        %v664 = vld [vmem:[%s521 + $0x10] sm:$0xf]
        %v665 = vld [vmem:[%s521 + $0x14] sm:$0xf]
        %v666 = vld [vmem:[%s521 + $0x18] sm:$0xf]
        %v667 = vld [vmem:[%s521 + $0x1c] sm:$0xf]
        %v668 = vld [vmem:[%s521 + $0x20] sm:$0xf]
        %v669 = vld [vmem:[%s521 + $0x24] sm:$0xf]
        %v670 = vld [vmem:[%s521 + $0x28] sm:$0xf]
        %v671 = vld [vmem:[%s521 + $0x2c] sm:$0xf]
        %v672 = vld [vmem:[%s521 + $0x30] sm:$0xf]
        %v673 = vld [vmem:[%s521 + $0x34] sm:$0xf]
        %v674 = vld [vmem:[%s521 + $0x38] sm:$0xf]
        %v675 = vld [vmem:[%s521 + $0x3c] sm:$0xf]
        %v676 = vld [vmem:[%s584] sm:$0xff]
        %v677 = vld [vmem:[%s584 + $0x8] sm:$0xff]
        %v678 = vld [vmem:[%s512] sm:$0xff]
        %v679 = vld [vmem:[%s512 + $0x8] sm:$0xff]
        %v680 = vld [vmem:[%s512 + $0x10] sm:$0xff]
        %v681 = vld [vmem:[%s512 + $0x18] sm:$0xff]
        %v682 = vld [vmem:[%s512 + $0x20] sm:$0xff]
        %v683 = vld [vmem:[%s512 + $0x28] sm:$0xff]
        %v684 = vld [vmem:[%s512 + $0x30] sm:$0xff]
        %v685 = vld [vmem:[%s512 + $0x38] sm:$0xff]
        %v686 = vld [vmem:[%s512 + $0x40] sm:$0xff]
        %v687 = vld [vmem:[%s512 + $0x48] sm:$0xff]
        %v688 = vld [vmem:[%s512 + $0x50] sm:$0xff]
        %v689 = vld [vmem:[%s512 + $0x58] sm:$0xff]
        %v690 = vld [vmem:[%s512 + $0x60] sm:$0xff]
        %v691 = vld [vmem:[%s512 + $0x68] sm:$0xff]
        %v692 = vld [vmem:[%s512 + $0x70] sm:$0xff]
        %v693 = vld [vmem:[%s512 + $0x78] sm:$0xff]
        %v694 = vpack.c.bf16 %v679, %v678
        %v695 = vpack.c.bf16 %v681, %v680
        %v696 = vpack.c.bf16 %v683, %v682
        %v697 = vpack.c.bf16 %v685, %v684
        %v698 = vpack.c.bf16 %v687, %v686
        %v699 = vpack.c.bf16 %v689, %v688
        %v700 = vpack.c.bf16 %v691, %v690
        %v701 = vpack.c.bf16 %v693, %v692
        %v718 = vunpack.c.l.b16 %v660
        %v719 = vunpack.c.l.b16 %v661
        %v720 = vunpack.c.l.b16 %v662
        %v721 = vunpack.c.l.b16 %v663
        %v722 = vunpack.c.l.b16 %v664
        %v723 = vunpack.c.l.b16 %v665
        %v724 = vunpack.c.l.b16 %v666
        %v725 = vunpack.c.l.b16 %v667
        %v726 = vunpack.c.l.b16 %v668
        %v727 = vunpack.c.l.b16 %v669
        %v728 = vunpack.c.l.b16 %v670
        %v729 = vunpack.c.l.b16 %v671
        %v730 = vunpack.c.l.b16 %v672
        %v731 = vunpack.c.l.b16 %v673
        %v732 = vunpack.c.l.b16 %v674
        %v733 = vunpack.c.l.b16 %v675
        %v734 = vpack.c.b16 %v719, %v718
        %v735 = vpack.c.b16 %v721, %v720
        %v736 = vpack.c.b16 %v723, %v722
        %v737 = vpack.c.b16 %v725, %v724
        %v738 = vpack.c.b16 %v727, %v726
        %v739 = vpack.c.b16 %v729, %v728
        %v740 = vpack.c.b16 %v731, %v730
        %v741 = vpack.c.b16 %v733, %v732
        %750 = vmatprep.subr.bf16.mxu0 0
        %751 = vmatpush1.bf16.msra.mxu0 %v701
        %752 = vmatprep.subr.bf16.mxu0 0
        %753 = vmatpush1.bf16.msra.mxu0 %v700
        %754 = vmatprep.subr.bf16.mxu0 0
        %755 = vmatpush1.bf16.msra.mxu0 %v699
        %756 = vmatprep.subr.bf16.mxu0 0
        %757 = vmatpush1.bf16.msra.mxu0 %v698
        %758 = vmatprep.subr.bf16.mxu0 0
        %759 = vmatpush1.bf16.msra.mxu0 %v697
        %760 = vmatprep.subr.bf16.mxu0 0
        %761 = vmatpush1.bf16.msra.mxu0 %v696
        %762 = vmatprep.subr.bf16.mxu0 0
        %763 = vmatpush1.bf16.msra.mxu0 %v695
        %764 = vmatprep.subr.bf16.mxu0 0
        %765 = vmatpush1.bf16.msra.mxu0 %v694
        %766 = vmatprep.subr.bf16.mxu0 0
        %767 = vmatpush2.bf16.msra.mxu0 0
        %768 = vmatprep.subr.bf16.mxu0 0
        %769 = vmatpush2.bf16.msra.mxu0 0
        %770 = vmatprep.subr.bf16.mxu0 0
        %771 = vmatpush2.bf16.msra.mxu0 0
        %772 = vmatprep.subr.bf16.mxu0 0
        %773 = vmatpush2.bf16.msra.mxu0 0
        %774 = vmatprep.subr.bf16.mxu0 0
        %775 = vmatpush2.bf16.msra.mxu0 0
        %776 = vmatprep.subr.bf16.mxu0 0
        %777 = vmatpush2.bf16.msra.mxu0 0
        %778 = vmatprep.subr.bf16.mxu0 0
        %779 = vmatpush2.bf16.msra.mxu0 0
        %780 = vmatprep.subr.bf16.mxu0 0
        %781 = vmatpush2.bf16.msra.mxu0 0
        %782 = vmatprep.mubr.bf16.mxu0 0
        %783 = vmatmul.mubr.bf16.gmra.mxu0 %v734
        %v784 = vpop.f32.mrf.mxu0
        %v785 = vadd.f32 0.0, %v784
        %v786 = vpop.f32.mrf.mxu0
        %v787 = vpop.f32.mrf.mxu0
        %v788 = vadd.f32 0.0, %v787
        %v789 = vpop.f32.mrf.mxu0
        %790 = vmatprep.mubr.bf16.mxu0 0
        %791 = vmatmul.mubr.bf16.gmra.mxu0 %v735
        %v792 = vpop.f32.mrf.mxu0
        %v793 = vadd.f32 0.0, %v792
        %v794 = vpop.f32.mrf.mxu0
        %v795 = vpop.f32.mrf.mxu0
        %v796 = vadd.f32 0.0, %v795
        %v797 = vpop.f32.mrf.mxu0
        %798 = vmatprep.mubr.bf16.mxu0 0
        %799 = vmatmul.mubr.bf16.gmra.mxu0 %v736
        %v800 = vpop.f32.mrf.mxu0
        %v801 = vadd.f32 0.0, %v800
        %v802 = vpop.f32.mrf.mxu0
        %v803 = vpop.f32.mrf.mxu0
        %v804 = vadd.f32 0.0, %v803
        %v805 = vpop.f32.mrf.mxu0
        %806 = vmatprep.mubr.bf16.mxu0 0
        %807 = vmatmul.mubr.bf16.gmra.mxu0 %v737
        %v808 = vpop.f32.mrf.mxu0
        %v809 = vadd.f32 0.0, %v808
        %v810 = vpop.f32.mrf.mxu0
        %v811 = vpop.f32.mrf.mxu0
        %v812 = vadd.f32 0.0, %v811
        %v813 = vpop.f32.mrf.mxu0
        %814 = vmatprep.mubr.bf16.mxu0 0
        %815 = vmatmul.mubr.bf16.gmra.mxu0 %v738
        %v816 = vpop.f32.mrf.mxu0
        %v817 = vadd.f32 0.0, %v816
        %v818 = vpop.f32.mrf.mxu0
        %v819 = vpop.f32.mrf.mxu0
        %v820 = vadd.f32 0.0, %v819
        %v821 = vpop.f32.mrf.mxu0
        %822 = vmatprep.mubr.bf16.mxu0 0
        %823 = vmatmul.mubr.bf16.gmra.mxu0 %v739
        %v824 = vpop.f32.mrf.mxu0
        %v825 = vadd.f32 0.0, %v824
        %v826 = vpop.f32.mrf.mxu0
        %v827 = vpop.f32.mrf.mxu0
        %v828 = vadd.f32 0.0, %v827
        %v829 = vpop.f32.mrf.mxu0
        %830 = vmatprep.mubr.bf16.mxu0 0
        %831 = vmatmul.mubr.bf16.gmra.mxu0 %v740
        %v832 = vpop.f32.mrf.mxu0
        %v833 = vadd.f32 0.0, %v832
        %v834 = vpop.f32.mrf.mxu0
        %v835 = vpop.f32.mrf.mxu0
        %v836 = vadd.f32 0.0, %v835
        %v837 = vpop.f32.mrf.mxu0
        %838 = vmatprep.mubr.bf16.mxu0 0
        %839 = vmatmul.mubr.bf16.gmra.mxu0 %v741
        %v840 = vpop.f32.mrf.mxu0
        %v841 = vadd.f32 0.0, %v840
        %v842 = vpop.f32.mrf.mxu0
        %v843 = vpop.f32.mrf.mxu0
        %v844 = vadd.f32 0.0, %v843
        %v845 = vpop.f32.mrf.mxu0
        %846 = vdwg.mxu0
        %v847 = vld [vmem:[%s530] sm:$0xff]
        %v848 = vld [vmem:[%s530 + $0x8] sm:$0xff]
        %v849 = vld [vmem:[%s530 + $0x10] sm:$0xff]
        %v850 = vld [vmem:[%s530 + $0x18] sm:$0xff]
        %v851 = vld [vmem:[%s530 + $0x20] sm:$0xff]
        %v852 = vld [vmem:[%s530 + $0x28] sm:$0xff]
        %v853 = vld [vmem:[%s530 + $0x30] sm:$0xff]
        %v854 = vld [vmem:[%s530 + $0x38] sm:$0xff]
        %v855 = vld [vmem:[%s530 + $0x40] sm:$0xff]
        %v856 = vld [vmem:[%s530 + $0x48] sm:$0xff]
        %v857 = vld [vmem:[%s530 + $0x50] sm:$0xff]
        %v858 = vld [vmem:[%s530 + $0x58] sm:$0xff]
        %v859 = vld [vmem:[%s530 + $0x60] sm:$0xff]
        %v860 = vld [vmem:[%s530 + $0x68] sm:$0xff]
        %v861 = vld [vmem:[%s530 + $0x70] sm:$0xff]
        %v862 = vld [vmem:[%s530 + $0x78] sm:$0xff]
        %v863 = vld [vmem:[%s539] sm:$0xff]
        %v864 = vld [vmem:[%s539 + $0x8] sm:$0xff]
        %v865 = vld [vmem:[%s539 + $0x10] sm:$0xff]
        %v866 = vld [vmem:[%s539 + $0x18] sm:$0xff]
        %v867 = vld [vmem:[%s539 + $0x20] sm:$0xff]
        %v868 = vld [vmem:[%s539 + $0x28] sm:$0xff]
        %v869 = vld [vmem:[%s539 + $0x30] sm:$0xff]
        %v870 = vld [vmem:[%s539 + $0x38] sm:$0xff]
        %v871 = vld [vmem:[%s539 + $0x40] sm:$0xff]
        %v872 = vld [vmem:[%s539 + $0x48] sm:$0xff]
        %v873 = vld [vmem:[%s539 + $0x50] sm:$0xff]
        %v874 = vld [vmem:[%s539 + $0x58] sm:$0xff]
        %v875 = vld [vmem:[%s539 + $0x60] sm:$0xff]
        %v876 = vld [vmem:[%s539 + $0x68] sm:$0xff]
        %v877 = vld [vmem:[%s539 + $0x70] sm:$0xff]
        %v878 = vld [vmem:[%s539 + $0x78] sm:$0xff]
        %879 = vmatprep.subr.mxu0 0.0
        %880 = vmatpush1.msra.mxu0 %v878
        %881 = vmatprep.subr.mxu0 0.0
        %882 = vmatpush1.msra.mxu0 %v877
        %883 = vmatprep.subr.mxu0 0.0
        %884 = vmatpush1.msra.mxu0 %v876
        %885 = vmatprep.subr.mxu0 0.0
        %886 = vmatpush1.msra.mxu0 %v875
        %887 = vmatprep.subr.mxu0 0.0
        %888 = vmatpush1.msra.mxu0 %v874
        %889 = vmatprep.subr.mxu0 0.0
        %890 = vmatpush1.msra.mxu0 %v873
        %891 = vmatprep.subr.mxu0 0.0
        %892 = vmatpush1.msra.mxu0 %v872
        %893 = vmatprep.subr.mxu0 0.0
        %894 = vmatpush1.msra.mxu0 %v871
        %895 = vmatprep.subr.mxu0 0.0
        %896 = vmatpush1.msra.mxu0 %v870
        %897 = vmatprep.subr.mxu0 0.0
        %898 = vmatpush1.msra.mxu0 %v869
        %899 = vmatprep.subr.mxu0 0.0
        %900 = vmatpush1.msra.mxu0 %v868
        %901 = vmatprep.subr.mxu0 0.0
        %902 = vmatpush1.msra.mxu0 %v867
        %903 = vmatprep.subr.mxu0 0.0
        %904 = vmatpush1.msra.mxu0 %v866
        %905 = vmatprep.subr.mxu0 0.0
        %906 = vmatpush1.msra.mxu0 %v865
        %907 = vmatprep.subr.mxu0 0.0
        %908 = vmatpush1.msra.mxu0 %v864
        %909 = vmatprep.subr.mxu0 0.0
        %910 = vmatpush1.msra.mxu0 %v863
        %911 = vmatprep.subr.mxu0 0.0
        %912 = vmatpush2.msra.mxu0 0.0
        %913 = vmatprep.subr.mxu0 0.0
        %914 = vmatpush2.msra.mxu0 0.0
        %915 = vmatprep.subr.mxu0 0.0
        %916 = vmatpush2.msra.mxu0 0.0
        %917 = vmatprep.subr.mxu0 0.0
        %918 = vmatpush2.msra.mxu0 0.0
        %919 = vmatprep.subr.mxu0 0.0
        %920 = vmatpush2.msra.mxu0 0.0
        %921 = vmatprep.subr.mxu0 0.0
        %922 = vmatpush2.msra.mxu0 0.0
        %923 = vmatprep.subr.mxu0 0.0
        %924 = vmatpush2.msra.mxu0 0.0
        %925 = vmatprep.subr.mxu0 0.0
        %926 = vmatpush2.msra.mxu0 0.0
        %927 = vmatprep.subr.mxu0 0.0
        %928 = vmatpush2.msra.mxu0 0.0
        %929 = vmatprep.subr.mxu0 0.0
        %930 = vmatpush2.msra.mxu0 0.0
        %931 = vmatprep.subr.mxu0 0.0
        %932 = vmatpush2.msra.mxu0 0.0
        %933 = vmatprep.subr.mxu0 0.0
        %934 = vmatpush2.msra.mxu0 0.0
        %935 = vmatprep.subr.mxu0 0.0
        %936 = vmatpush2.msra.mxu0 0.0
        %937 = vmatprep.subr.mxu0 0.0
        %938 = vmatpush2.msra.mxu0 0.0
        %939 = vmatprep.subr.mxu0 0.0
        %940 = vmatpush2.msra.mxu0 0.0
        %941 = vmatprep.subr.mxu0 0.0
        %942 = vmatpush2.msra.mxu0 0.0
        %943 = vmatprep.mubr.f32.mxu0 0.0
        %944 = vmatmul.mubr.f32.gmra.mxu0 %v678
        %v945 = vpop.f32.mrf.mxu0
        %v946 = vadd.f32 0.0, %v945
        %v947 = vpop.f32.mrf.mxu0
        %948 = vmatprep.mubr.f32.mxu0 0.0
        %949 = vmatmul.mubr.f32.gmra.mxu0 %v679
        %v950 = vpop.f32.mrf.mxu0
        %v951 = vadd.f32 0.0, %v950
        %v952 = vpop.f32.mrf.mxu0
        %953 = vmatprep.mubr.f32.mxu0 0.0
        %954 = vmatmul.mubr.f32.gmra.mxu0 %v680
        %v955 = vpop.f32.mrf.mxu0
        %v956 = vadd.f32 0.0, %v955
        %v957 = vpop.f32.mrf.mxu0
        %958 = vmatprep.mubr.f32.mxu0 0.0
        %959 = vmatmul.mubr.f32.gmra.mxu0 %v681
        %v960 = vpop.f32.mrf.mxu0
        %v961 = vadd.f32 0.0, %v960
        %v962 = vpop.f32.mrf.mxu0
        %963 = vmatprep.mubr.f32.mxu0 0.0
        %964 = vmatmul.mubr.f32.gmra.mxu0 %v682
        %v965 = vpop.f32.mrf.mxu0
        %v966 = vadd.f32 0.0, %v965
        %v967 = vpop.f32.mrf.mxu0
        %968 = vmatprep.mubr.f32.mxu0 0.0
        %969 = vmatmul.mubr.f32.gmra.mxu0 %v683
        %v970 = vpop.f32.mrf.mxu0
        %v971 = vadd.f32 0.0, %v970
        %v972 = vpop.f32.mrf.mxu0
        %973 = vmatprep.mubr.f32.mxu0 0.0
        %974 = vmatmul.mubr.f32.gmra.mxu0 %v684
        %v975 = vpop.f32.mrf.mxu0
        %v976 = vadd.f32 0.0, %v975
        %v977 = vpop.f32.mrf.mxu0
        %978 = vmatprep.mubr.f32.mxu0 0.0
        %979 = vmatmul.mubr.f32.gmra.mxu0 %v685
        %v980 = vpop.f32.mrf.mxu0
        %v981 = vadd.f32 0.0, %v980
        %v982 = vpop.f32.mrf.mxu0
        %983 = vmatprep.mubr.f32.mxu0 0.0
        %984 = vmatmul.mubr.f32.gmra.mxu0 %v686
        %v985 = vpop.f32.mrf.mxu0
        %v986 = vadd.f32 0.0, %v985
        %v987 = vpop.f32.mrf.mxu0
        %988 = vmatprep.mubr.f32.mxu0 0.0
        %989 = vmatmul.mubr.f32.gmra.mxu0 %v687
        %v990 = vpop.f32.mrf.mxu0
        %v991 = vadd.f32 0.0, %v990
        %v992 = vpop.f32.mrf.mxu0
        %993 = vmatprep.mubr.f32.mxu0 0.0
        %994 = vmatmul.mubr.f32.gmra.mxu0 %v688
        %v995 = vpop.f32.mrf.mxu0
        %v996 = vadd.f32 0.0, %v995
        %v997 = vpop.f32.mrf.mxu0
        %998 = vmatprep.mubr.f32.mxu0 0.0
        %999 = vmatmul.mubr.f32.gmra.mxu0 %v689
        %v1000 = vpop.f32.mrf.mxu0
        %v1001 = vadd.f32 0.0, %v1000
        %v1002 = vpop.f32.mrf.mxu0
        %1003 = vmatprep.mubr.f32.mxu0 0.0
        %1004 = vmatmul.mubr.f32.gmra.mxu0 %v690
        %v1005 = vpop.f32.mrf.mxu0
        %v1006 = vadd.f32 0.0, %v1005
        %v1007 = vpop.f32.mrf.mxu0
        %1008 = vmatprep.mubr.f32.mxu0 0.0
        %1009 = vmatmul.mubr.f32.gmra.mxu0 %v691
        %v1010 = vpop.f32.mrf.mxu0
        %v1011 = vadd.f32 0.0, %v1010
        %v1012 = vpop.f32.mrf.mxu0
        %1013 = vmatprep.mubr.f32.mxu0 0.0
        %1014 = vmatmul.mubr.f32.gmra.mxu0 %v692
        %v1015 = vpop.f32.mrf.mxu0
        %v1016 = vadd.f32 0.0, %v1015
        %v1017 = vpop.f32.mrf.mxu0
        %1018 = vmatprep.mubr.f32.mxu0 0.0
        %1019 = vmatmul.mubr.f32.gmra.mxu0 %v693
        %v1020 = vpop.f32.mrf.mxu0
        %v1021 = vadd.f32 0.0, %v1020
        %v1022 = vpop.f32.mrf.mxu0
        %1023 = vdwg.mxu0
        %1024 = vmatprep.subr.mxu0 0.0
        %1025 = vmatpush1.msra.mxu0 %v862
        %1026 = vmatprep.subr.mxu0 0.0
        %1027 = vmatpush1.msra.mxu0 %v861
        %1028 = vmatprep.subr.mxu0 0.0
        %1029 = vmatpush1.msra.mxu0 %v860
        %1030 = vmatprep.subr.mxu0 0.0
        %1031 = vmatpush1.msra.mxu0 %v859
        %1032 = vmatprep.subr.mxu0 0.0
        %1033 = vmatpush1.msra.mxu0 %v858
        %1034 = vmatprep.subr.mxu0 0.0
        %1035 = vmatpush1.msra.mxu0 %v857
        %1036 = vmatprep.subr.mxu0 0.0
        %1037 = vmatpush1.msra.mxu0 %v856
        %1038 = vmatprep.subr.mxu0 0.0
        %1039 = vmatpush1.msra.mxu0 %v855
        %1040 = vmatprep.subr.mxu0 0.0
        %1041 = vmatpush1.msra.mxu0 %v854
        %1042 = vmatprep.subr.mxu0 0.0
        %1043 = vmatpush1.msra.mxu0 %v853
        %1044 = vmatprep.subr.mxu0 0.0
        %1045 = vmatpush1.msra.mxu0 %v852
        %1046 = vmatprep.subr.mxu0 0.0
        %1047 = vmatpush1.msra.mxu0 %v851
        %1048 = vmatprep.subr.mxu0 0.0
        %1049 = vmatpush1.msra.mxu0 %v850
        %1050 = vmatprep.subr.mxu0 0.0
        %1051 = vmatpush1.msra.mxu0 %v849
        %1052 = vmatprep.subr.mxu0 0.0
        %1053 = vmatpush1.msra.mxu0 %v848
        %1054 = vmatprep.subr.mxu0 0.0
        %1055 = vmatpush1.msra.mxu0 %v847
        %1056 = vmatprep.subr.mxu0 0.0
        %1057 = vmatpush2.msra.mxu0 0.0
        %1058 = vmatprep.subr.mxu0 0.0
        %1059 = vmatpush2.msra.mxu0 0.0
        %1060 = vmatprep.subr.mxu0 0.0
        %1061 = vmatpush2.msra.mxu0 0.0
        %1062 = vmatprep.subr.mxu0 0.0
        %1063 = vmatpush2.msra.mxu0 0.0
        %1064 = vmatprep.subr.mxu0 0.0
        %1065 = vmatpush2.msra.mxu0 0.0
        %1066 = vmatprep.subr.mxu0 0.0
        %1067 = vmatpush2.msra.mxu0 0.0
        %1068 = vmatprep.subr.mxu0 0.0
        %1069 = vmatpush2.msra.mxu0 0.0
        %1070 = vmatprep.subr.mxu0 0.0
        %1071 = vmatpush2.msra.mxu0 0.0
        %1072 = vmatprep.subr.mxu0 0.0
        %1073 = vmatpush2.msra.mxu0 0.0
        %1074 = vmatprep.subr.mxu0 0.0
        %1075 = vmatpush2.msra.mxu0 0.0
        %1076 = vmatprep.subr.mxu0 0.0
        %1077 = vmatpush2.msra.mxu0 0.0
        %1078 = vmatprep.subr.mxu0 0.0
        %1079 = vmatpush2.msra.mxu0 0.0
        %1080 = vmatprep.subr.mxu0 0.0
        %1081 = vmatpush2.msra.mxu0 0.0
        %1082 = vmatprep.subr.mxu0 0.0
        %1083 = vmatpush2.msra.mxu0 0.0
        %1084 = vmatprep.subr.mxu0 0.0
        %1085 = vmatpush2.msra.mxu0 0.0
        %1086 = vmatprep.subr.mxu0 0.0
        %1087 = vmatpush2.msra.mxu0 0.0
        %1088 = vmatprep.mubr.f32.mxu0 0.0
        %1089 = vmatmul.mubr.f32.gmra.mxu0 %v785
        %v1090 = vpop.f32.mrf.mxu0
        %v1091 = vadd.f32 %v946, %v1090
        %v1092 = vpop.f32.mrf.mxu0
        %1093 = vmatprep.mubr.f32.mxu0 0.0
        %1094 = vmatmul.mubr.f32.gmra.mxu0 %v788
        %v1095 = vpop.f32.mrf.mxu0
        %v1096 = vadd.f32 %v951, %v1095
        %v1097 = vpop.f32.mrf.mxu0
        %1098 = vmatprep.mubr.f32.mxu0 0.0
        %1099 = vmatmul.mubr.f32.gmra.mxu0 %v793
        %v1100 = vpop.f32.mrf.mxu0
        %v1101 = vadd.f32 %v956, %v1100
        %v1102 = vpop.f32.mrf.mxu0
        %1103 = vmatprep.mubr.f32.mxu0 0.0
        %1104 = vmatmul.mubr.f32.gmra.mxu0 %v796
        %v1105 = vpop.f32.mrf.mxu0
        %v1106 = vadd.f32 %v961, %v1105
        %v1107 = vpop.f32.mrf.mxu0
        %1108 = vmatprep.mubr.f32.mxu0 0.0
        %1109 = vmatmul.mubr.f32.gmra.mxu0 %v801
        %v1110 = vpop.f32.mrf.mxu0
        %v1111 = vadd.f32 %v966, %v1110
        %v1112 = vpop.f32.mrf.mxu0
        %1113 = vmatprep.mubr.f32.mxu0 0.0
        %1114 = vmatmul.mubr.f32.gmra.mxu0 %v804
        %v1115 = vpop.f32.mrf.mxu0
        %v1116 = vadd.f32 %v971, %v1115
        %v1117 = vpop.f32.mrf.mxu0
        %1118 = vmatprep.mubr.f32.mxu0 0.0
        %1119 = vmatmul.mubr.f32.gmra.mxu0 %v809
        %v1120 = vpop.f32.mrf.mxu0
        %v1121 = vadd.f32 %v976, %v1120
        %v1122 = vpop.f32.mrf.mxu0
        %1123 = vmatprep.mubr.f32.mxu0 0.0
        %1124 = vmatmul.mubr.f32.gmra.mxu0 %v812
        %v1125 = vpop.f32.mrf.mxu0
        %v1126 = vadd.f32 %v981, %v1125
        %v1127 = vpop.f32.mrf.mxu0
        %1128 = vmatprep.mubr.f32.mxu0 0.0
        %1129 = vmatmul.mubr.f32.gmra.mxu0 %v817
        %v1130 = vpop.f32.mrf.mxu0
        %v1131 = vadd.f32 %v986, %v1130
        %v1132 = vpop.f32.mrf.mxu0
        %1133 = vmatprep.mubr.f32.mxu0 0.0
        %1134 = vmatmul.mubr.f32.gmra.mxu0 %v820
        %v1135 = vpop.f32.mrf.mxu0
        %v1136 = vadd.f32 %v991, %v1135
        %v1137 = vpop.f32.mrf.mxu0
        %1138 = vmatprep.mubr.f32.mxu0 0.0
        %1139 = vmatmul.mubr.f32.gmra.mxu0 %v825
        %v1140 = vpop.f32.mrf.mxu0
        %v1141 = vadd.f32 %v996, %v1140
        %v1142 = vpop.f32.mrf.mxu0
        %1143 = vmatprep.mubr.f32.mxu0 0.0
        %1144 = vmatmul.mubr.f32.gmra.mxu0 %v828
        %v1145 = vpop.f32.mrf.mxu0
        %v1146 = vadd.f32 %v1001, %v1145
        %v1147 = vpop.f32.mrf.mxu0
        %1148 = vmatprep.mubr.f32.mxu0 0.0
        %1149 = vmatmul.mubr.f32.gmra.mxu0 %v833
        %v1150 = vpop.f32.mrf.mxu0
        %v1151 = vadd.f32 %v1006, %v1150
        %v1152 = vpop.f32.mrf.mxu0
        %1153 = vmatprep.mubr.f32.mxu0 0.0
        %1154 = vmatmul.mubr.f32.gmra.mxu0 %v836
        %v1155 = vpop.f32.mrf.mxu0
        %v1156 = vadd.f32 %v1011, %v1155
        %v1157 = vpop.f32.mrf.mxu0
        %1158 = vmatprep.mubr.f32.mxu0 0.0
        %1159 = vmatmul.mubr.f32.gmra.mxu0 %v841
        %v1160 = vpop.f32.mrf.mxu0
        %v1161 = vadd.f32 %v1016, %v1160
        %v1162 = vpop.f32.mrf.mxu0
        %1163 = vmatprep.mubr.f32.mxu0 0.0
        %1164 = vmatmul.mubr.f32.gmra.mxu0 %v844
        %v1165 = vpop.f32.mrf.mxu0
        %v1166 = vadd.f32 %v1021, %v1165
        %v1167 = vpop.f32.mrf.mxu0
        %1168 = vdwg.mxu0
        %v1169 = vlaneseq
        %v1170 = vshrl.u32 %v1169, 7
        %v1171 = vsub.s32 0, %v1170
        %v1172 = vrot.slane %v676, %v1171
        %v1173 = vadd.f32 %v1091, %v1172
        %v1174 = vadd.f32 %v1096, %v1172
        %v1175 = vadd.f32 %v1101, %v1172
        %v1176 = vadd.f32 %v1106, %v1172
        %v1177 = vadd.f32 %v1111, %v1172
        %v1178 = vadd.f32 %v1116, %v1172
        %v1179 = vadd.f32 %v1121, %v1172
        %v1180 = vadd.f32 %v1126, %v1172
        %v1181 = vadd.f32 %v1131, %v1172
        %v1182 = vadd.f32 %v1136, %v1172
        %v1183 = vadd.f32 %v1141, %v1172
        %v1184 = vadd.f32 %v1146, %v1172
        %v1185 = vadd.f32 %v1151, %v1172
        %v1186 = vadd.f32 %v1156, %v1172
        %v1187 = vadd.f32 %v1161, %v1172
        %v1188 = vadd.f32 %v1166, %v1172
        %vm1189 = vcmp.ge.f32.partialorder %v1173, 0.0
        %vm1190 = vcmp.ge.f32.partialorder %v1174, 0.0
        %vm1191 = vcmp.ge.f32.partialorder %v1175, 0.0
        %vm1192 = vcmp.ge.f32.partialorder %v1176, 0.0
        %vm1193 = vcmp.ge.f32.partialorder %v1177, 0.0
        %vm1194 = vcmp.ge.f32.partialorder %v1178, 0.0
        %vm1195 = vcmp.ge.f32.partialorder %v1179, 0.0
        %vm1196 = vcmp.ge.f32.partialorder %v1180, 0.0
        %vm1197 = vcmp.ge.f32.partialorder %v1181, 0.0
        %vm1198 = vcmp.ge.f32.partialorder %v1182, 0.0
        %vm1199 = vcmp.ge.f32.partialorder %v1183, 0.0
        %vm1200 = vcmp.ge.f32.partialorder %v1184, 0.0
        %vm1201 = vcmp.ge.f32.partialorder %v1185, 0.0
        %vm1202 = vcmp.ge.f32.partialorder %v1186, 0.0
        %vm1203 = vcmp.ge.f32.partialorder %v1187, 0.0
        %vm1204 = vcmp.ge.f32.partialorder %v1188, 0.0
        %v1205 = vmul.f32 %v1173, 0.01
        %v1206 = vmul.f32 %v1174, 0.01
        %v1207 = vmul.f32 %v1175, 0.01
        %v1208 = vmul.f32 %v1176, 0.01
        %v1209 = vmul.f32 %v1177, 0.01
        %v1210 = vmul.f32 %v1178, 0.01
        %v1211 = vmul.f32 %v1179, 0.01
        %v1212 = vmul.f32 %v1180, 0.01
        %v1213 = vmul.f32 %v1181, 0.01
        %v1214 = vmul.f32 %v1182, 0.01
        %v1215 = vmul.f32 %v1183, 0.01
        %v1216 = vmul.f32 %v1184, 0.01
        %v1217 = vmul.f32 %v1185, 0.01
        %v1218 = vmul.f32 %v1186, 0.01
        %v1219 = vmul.f32 %v1187, 0.01
        %v1220 = vmul.f32 %v1188, 0.01
        %v1221 = vsel %vm1189, %v1173, %v1205
        %v1222 = vsel %vm1190, %v1174, %v1206
        %v1223 = vsel %vm1191, %v1175, %v1207
        %v1224 = vsel %vm1192, %v1176, %v1208
        %v1225 = vsel %vm1193, %v1177, %v1209
        %v1226 = vsel %vm1194, %v1178, %v1210
        %v1227 = vsel %vm1195, %v1179, %v1211
        %v1228 = vsel %vm1196, %v1180, %v1212
        %v1229 = vsel %vm1197, %v1181, %v1213
        %v1230 = vsel %vm1198, %v1182, %v1214
        %v1231 = vsel %vm1199, %v1183, %v1215
        %v1232 = vsel %vm1200, %v1184, %v1216
        %v1233 = vsel %vm1201, %v1185, %v1217
        %v1234 = vsel %vm1202, %v1186, %v1218
        %v1235 = vsel %vm1203, %v1187, %v1219
        %v1236 = vsel %vm1204, %v1188, %v1220
        %v1237 = vlaneseq
        %v1238 = vshrl.u32 %v1237, 7
        %v1239 = vsub.s32 1, %v1238
        %v1240 = vrot.slane %v676, %v1239
        %v1241 = vmul.f32 %v1221, %v1240
        %v1242 = vmul.f32 %v1222, %v1240
        %v1243 = vmul.f32 %v1223, %v1240
        %v1244 = vmul.f32 %v1224, %v1240
        %v1245 = vmul.f32 %v1225, %v1240
        %v1246 = vmul.f32 %v1226, %v1240
        %v1247 = vmul.f32 %v1227, %v1240
        %v1248 = vmul.f32 %v1228, %v1240
        %v1249 = vmul.f32 %v1229, %v1240
        %v1250 = vmul.f32 %v1230, %v1240
        %v1251 = vmul.f32 %v1231, %v1240
        %v1252 = vmul.f32 %v1232, %v1240
        %v1253 = vmul.f32 %v1233, %v1240
        %v1254 = vmul.f32 %v1234, %v1240
        %v1255 = vmul.f32 %v1235, %v1240
        %v1256 = vmul.f32 %v1236, %v1240
        %v1257 = vlaneseq
        %v1258 = vshrl.u32 %v1257, 7
        %v1259 = vsub.s32 2, %v1258
        %v1260 = vrot.slane %v676, %v1259
        %v1261 = vadd.f32 %v1241, %v1260
        %v1262 = vadd.f32 %v1242, %v1260
        %v1263 = vadd.f32 %v1243, %v1260
        %v1264 = vadd.f32 %v1244, %v1260
        %v1265 = vadd.f32 %v1245, %v1260
        %v1266 = vadd.f32 %v1246, %v1260
        %v1267 = vadd.f32 %v1247, %v1260
        %v1268 = vadd.f32 %v1248, %v1260
        %v1269 = vadd.f32 %v1249, %v1260
        %v1270 = vadd.f32 %v1250, %v1260
        %v1271 = vadd.f32 %v1251, %v1260
        %v1272 = vadd.f32 %v1252, %v1260
        %v1273 = vadd.f32 %v1253, %v1260
        %v1274 = vadd.f32 %v1254, %v1260
        %v1275 = vadd.f32 %v1255, %v1260
        %v1276 = vadd.f32 %v1256, %v1260
        %v1277 = vmul.f32 %v1261, 0.7
        %v1278 = vmul.f32 %v1262, 0.7
        %v1279 = vmul.f32 %v1263, 0.7
        %v1280 = vmul.f32 %v1264, 0.7
        %v1281 = vmul.f32 %v1265, 0.7
        %v1282 = vmul.f32 %v1266, 0.7
        %v1283 = vmul.f32 %v1267, 0.7
        %v1284 = vmul.f32 %v1268, 0.7
        %v1285 = vmul.f32 %v1269, 0.7
        %v1286 = vmul.f32 %v1270, 0.7
        %v1287 = vmul.f32 %v1271, 0.7
        %v1288 = vmul.f32 %v1272, 0.7
        %v1289 = vmul.f32 %v1273, 0.7
        %v1290 = vmul.f32 %v1274, 0.7
        %v1291 = vmul.f32 %v1275, 0.7
        %v1292 = vmul.f32 %v1276, 0.7
        %1293 = vst [vmem:[%s658] sm:$0xff] %v1277
        %1294 = vst [vmem:[%s658 + $0x8] sm:$0xff] %v1278
        %1295 = vst [vmem:[%s658 + $0x10] sm:$0xff] %v1279
        %1296 = vst [vmem:[%s658 + $0x18] sm:$0xff] %v1280
        %1297 = vst [vmem:[%s658 + $0x20] sm:$0xff] %v1281
        %1298 = vst [vmem:[%s658 + $0x28] sm:$0xff] %v1282
        %1299 = vst [vmem:[%s658 + $0x30] sm:$0xff] %v1283
        %1300 = vst [vmem:[%s658 + $0x38] sm:$0xff] %v1284
        %1301 = vst [vmem:[%s658 + $0x40] sm:$0xff] %v1285
        %1302 = vst [vmem:[%s658 + $0x48] sm:$0xff] %v1286
        %1303 = vst [vmem:[%s658 + $0x50] sm:$0xff] %v1287
        %1304 = vst [vmem:[%s658 + $0x58] sm:$0xff] %v1288
        %1305 = vst [vmem:[%s658 + $0x60] sm:$0xff] %v1289
        %1306 = vst [vmem:[%s658 + $0x68] sm:$0xff] %v1290
        %1307 = vst [vmem:[%s658 + $0x70] sm:$0xff] %v1291
        %1308 = vst [vmem:[%s658 + $0x78] sm:$0xff] %v1292
        %v1309 = vpack.c.bf16 %v1262, %v1261
        %v1310 = vpack.c.bf16 %v1264, %v1263
        %v1311 = vpack.c.bf16 %v1266, %v1265
        %v1312 = vpack.c.bf16 %v1268, %v1267
        %v1313 = vpack.c.bf16 %v1270, %v1269
        %v1314 = vpack.c.bf16 %v1272, %v1271
        %v1315 = vpack.c.bf16 %v1274, %v1273
        %v1316 = vpack.c.bf16 %v1276, %v1275
        %1317 = vmatprep.subr.bf16.mxu0 0
        %1318 = vmatpush1.bf16.msra.mxu0 %v1316
        %1319 = vmatprep.subr.bf16.mxu0 0
        %1320 = vmatpush1.bf16.msra.mxu0 %v1315
        %1321 = vmatprep.subr.bf16.mxu0 0
        %1322 = vmatpush1.bf16.msra.mxu0 %v1314
        %1323 = vmatprep.subr.bf16.mxu0 0
        %1324 = vmatpush1.bf16.msra.mxu0 %v1313
        %1325 = vmatprep.subr.bf16.mxu0 0
        %1326 = vmatpush1.bf16.msra.mxu0 %v1312
        %1327 = vmatprep.subr.bf16.mxu0 0
        %1328 = vmatpush1.bf16.msra.mxu0 %v1311
        %1329 = vmatprep.subr.bf16.mxu0 0
        %1330 = vmatpush1.bf16.msra.mxu0 %v1310
        %1331 = vmatprep.subr.bf16.mxu0 0
        %1332 = vmatpush1.bf16.msra.mxu0 %v1309
        %1333 = vmatprep.subr.bf16.mxu0 0
        %1334 = vmatpush2.bf16.msra.mxu0 0
        %1335 = vmatprep.subr.bf16.mxu0 0
        %1336 = vmatpush2.bf16.msra.mxu0 0
        %1337 = vmatprep.subr.bf16.mxu0 0
        %1338 = vmatpush2.bf16.msra.mxu0 0
        %1339 = vmatprep.subr.bf16.mxu0 0
        %1340 = vmatpush2.bf16.msra.mxu0 0
        %1341 = vmatprep.subr.bf16.mxu0 0
        %1342 = vmatpush2.bf16.msra.mxu0 0
        %1343 = vmatprep.subr.bf16.mxu0 0
        %1344 = vmatpush2.bf16.msra.mxu0 0
        %1345 = vmatprep.subr.bf16.mxu0 0
        %1346 = vmatpush2.bf16.msra.mxu0 0
        %1347 = vmatprep.subr.bf16.mxu0 0
        %1348 = vmatpush2.bf16.msra.mxu0 0
        %1349 = vmatprep.mubr.bf16.mxu0 0
        %1350 = vmatmul.mubr.bf16.gmra.mxu0 %v734
        %v1351 = vpop.f32.mrf.mxu0
        %v1352 = vadd.f32 0.0, %v1351
        %v1353 = vpop.f32.mrf.mxu0
        %v1354 = vpop.f32.mrf.mxu0
        %v1355 = vadd.f32 0.0, %v1354
        %v1356 = vpop.f32.mrf.mxu0
        %1357 = vmatprep.mubr.bf16.mxu0 0
        %1358 = vmatmul.mubr.bf16.gmra.mxu0 %v735
        %v1359 = vpop.f32.mrf.mxu0
        %v1360 = vadd.f32 0.0, %v1359
        %v1361 = vpop.f32.mrf.mxu0
        %v1362 = vpop.f32.mrf.mxu0
        %v1363 = vadd.f32 0.0, %v1362
        %v1364 = vpop.f32.mrf.mxu0
        %1365 = vmatprep.mubr.bf16.mxu0 0
        %1366 = vmatmul.mubr.bf16.gmra.mxu0 %v736
        %v1367 = vpop.f32.mrf.mxu0
        %v1368 = vadd.f32 0.0, %v1367
        %v1369 = vpop.f32.mrf.mxu0
        %v1370 = vpop.f32.mrf.mxu0
        %v1371 = vadd.f32 0.0, %v1370
        %v1372 = vpop.f32.mrf.mxu0
        %1373 = vmatprep.mubr.bf16.mxu0 0
        %1374 = vmatmul.mubr.bf16.gmra.mxu0 %v737
        %v1375 = vpop.f32.mrf.mxu0
        %v1376 = vadd.f32 0.0, %v1375
        %v1377 = vpop.f32.mrf.mxu0
        %v1378 = vpop.f32.mrf.mxu0
        %v1379 = vadd.f32 0.0, %v1378
        %v1380 = vpop.f32.mrf.mxu0
        %1381 = vmatprep.mubr.bf16.mxu0 0
        %1382 = vmatmul.mubr.bf16.gmra.mxu0 %v738
        %v1383 = vpop.f32.mrf.mxu0
        %v1384 = vadd.f32 0.0, %v1383
        %v1385 = vpop.f32.mrf.mxu0
        %v1386 = vpop.f32.mrf.mxu0
        %v1387 = vadd.f32 0.0, %v1386
        %v1388 = vpop.f32.mrf.mxu0
        %1389 = vmatprep.mubr.bf16.mxu0 0
        %1390 = vmatmul.mubr.bf16.gmra.mxu0 %v739
        %v1391 = vpop.f32.mrf.mxu0
        %v1392 = vadd.f32 0.0, %v1391
        %v1393 = vpop.f32.mrf.mxu0
        %v1394 = vpop.f32.mrf.mxu0
        %v1395 = vadd.f32 0.0, %v1394
        %v1396 = vpop.f32.mrf.mxu0
        %1397 = vmatprep.mubr.bf16.mxu0 0
        %1398 = vmatmul.mubr.bf16.gmra.mxu0 %v740
        %v1399 = vpop.f32.mrf.mxu0
        %v1400 = vadd.f32 0.0, %v1399
        %v1401 = vpop.f32.mrf.mxu0
        %v1402 = vpop.f32.mrf.mxu0
        %v1403 = vadd.f32 0.0, %v1402
        %v1404 = vpop.f32.mrf.mxu0
        %1405 = vmatprep.mubr.bf16.mxu0 0
        %1406 = vmatmul.mubr.bf16.gmra.mxu0 %v741
        %v1407 = vpop.f32.mrf.mxu0
        %v1408 = vadd.f32 0.0, %v1407
        %v1409 = vpop.f32.mrf.mxu0
        %v1410 = vpop.f32.mrf.mxu0
        %v1411 = vadd.f32 0.0, %v1410
        %v1412 = vpop.f32.mrf.mxu0
        %1413 = vdwg.mxu0
        %v1414 = vld [vmem:[%s548] sm:$0xff]
        %v1415 = vld [vmem:[%s548 + $0x8] sm:$0xff]
        %v1416 = vld [vmem:[%s548 + $0x10] sm:$0xff]
        %v1417 = vld [vmem:[%s548 + $0x18] sm:$0xff]
        %v1418 = vld [vmem:[%s548 + $0x20] sm:$0xff]
        %v1419 = vld [vmem:[%s548 + $0x28] sm:$0xff]
        %v1420 = vld [vmem:[%s548 + $0x30] sm:$0xff]
        %v1421 = vld [vmem:[%s548 + $0x38] sm:$0xff]
        %v1422 = vld [vmem:[%s548 + $0x40] sm:$0xff]
        %v1423 = vld [vmem:[%s548 + $0x48] sm:$0xff]
        %v1424 = vld [vmem:[%s548 + $0x50] sm:$0xff]
        %v1425 = vld [vmem:[%s548 + $0x58] sm:$0xff]
        %v1426 = vld [vmem:[%s548 + $0x60] sm:$0xff]
        %v1427 = vld [vmem:[%s548 + $0x68] sm:$0xff]
        %v1428 = vld [vmem:[%s548 + $0x70] sm:$0xff]
        %v1429 = vld [vmem:[%s548 + $0x78] sm:$0xff]
        %v1430 = vld [vmem:[%s557] sm:$0xff]
        %v1431 = vld [vmem:[%s557 + $0x8] sm:$0xff]
        %v1432 = vld [vmem:[%s557 + $0x10] sm:$0xff]
        %v1433 = vld [vmem:[%s557 + $0x18] sm:$0xff]
        %v1434 = vld [vmem:[%s557 + $0x20] sm:$0xff]
        %v1435 = vld [vmem:[%s557 + $0x28] sm:$0xff]
        %v1436 = vld [vmem:[%s557 + $0x30] sm:$0xff]
        %v1437 = vld [vmem:[%s557 + $0x38] sm:$0xff]
        %v1438 = vld [vmem:[%s557 + $0x40] sm:$0xff]
        %v1439 = vld [vmem:[%s557 + $0x48] sm:$0xff]
        %v1440 = vld [vmem:[%s557 + $0x50] sm:$0xff]
        %v1441 = vld [vmem:[%s557 + $0x58] sm:$0xff]
        %v1442 = vld [vmem:[%s557 + $0x60] sm:$0xff]
        %v1443 = vld [vmem:[%s557 + $0x68] sm:$0xff]
        %v1444 = vld [vmem:[%s557 + $0x70] sm:$0xff]
        %v1445 = vld [vmem:[%s557 + $0x78] sm:$0xff]
        %1446 = vmatprep.subr.mxu0 0.0
        %1447 = vmatpush1.msra.mxu0 %v1445
        %1448 = vmatprep.subr.mxu0 0.0
        %1449 = vmatpush1.msra.mxu0 %v1444
        %1450 = vmatprep.subr.mxu0 0.0
        %1451 = vmatpush1.msra.mxu0 %v1443
        %1452 = vmatprep.subr.mxu0 0.0
        %1453 = vmatpush1.msra.mxu0 %v1442
        %1454 = vmatprep.subr.mxu0 0.0
        %1455 = vmatpush1.msra.mxu0 %v1441
        %1456 = vmatprep.subr.mxu0 0.0
        %1457 = vmatpush1.msra.mxu0 %v1440
        %1458 = vmatprep.subr.mxu0 0.0
        %1459 = vmatpush1.msra.mxu0 %v1439
        %1460 = vmatprep.subr.mxu0 0.0
        %1461 = vmatpush1.msra.mxu0 %v1438
        %1462 = vmatprep.subr.mxu0 0.0
        %1463 = vmatpush1.msra.mxu0 %v1437
        %1464 = vmatprep.subr.mxu0 0.0
        %1465 = vmatpush1.msra.mxu0 %v1436
        %1466 = vmatprep.subr.mxu0 0.0
        %1467 = vmatpush1.msra.mxu0 %v1435
        %1468 = vmatprep.subr.mxu0 0.0
        %1469 = vmatpush1.msra.mxu0 %v1434
        %1470 = vmatprep.subr.mxu0 0.0
        %1471 = vmatpush1.msra.mxu0 %v1433
        %1472 = vmatprep.subr.mxu0 0.0
        %1473 = vmatpush1.msra.mxu0 %v1432
        %1474 = vmatprep.subr.mxu0 0.0
        %1475 = vmatpush1.msra.mxu0 %v1431
        %1476 = vmatprep.subr.mxu0 0.0
        %1477 = vmatpush1.msra.mxu0 %v1430
        %1478 = vmatprep.subr.mxu0 0.0
        %1479 = vmatpush2.msra.mxu0 0.0
        %1480 = vmatprep.subr.mxu0 0.0
        %1481 = vmatpush2.msra.mxu0 0.0
        %1482 = vmatprep.subr.mxu0 0.0
        %1483 = vmatpush2.msra.mxu0 0.0
        %1484 = vmatprep.subr.mxu0 0.0
        %1485 = vmatpush2.msra.mxu0 0.0
        %1486 = vmatprep.subr.mxu0 0.0
        %1487 = vmatpush2.msra.mxu0 0.0
        %1488 = vmatprep.subr.mxu0 0.0
        %1489 = vmatpush2.msra.mxu0 0.0
        %1490 = vmatprep.subr.mxu0 0.0
        %1491 = vmatpush2.msra.mxu0 0.0
        %1492 = vmatprep.subr.mxu0 0.0
        %1493 = vmatpush2.msra.mxu0 0.0
        %1494 = vmatprep.subr.mxu0 0.0
        %1495 = vmatpush2.msra.mxu0 0.0
        %1496 = vmatprep.subr.mxu0 0.0
        %1497 = vmatpush2.msra.mxu0 0.0
        %1498 = vmatprep.subr.mxu0 0.0
        %1499 = vmatpush2.msra.mxu0 0.0
        %1500 = vmatprep.subr.mxu0 0.0
        %1501 = vmatpush2.msra.mxu0 0.0
        %1502 = vmatprep.subr.mxu0 0.0
        %1503 = vmatpush2.msra.mxu0 0.0
        %1504 = vmatprep.subr.mxu0 0.0
        %1505 = vmatpush2.msra.mxu0 0.0
        %1506 = vmatprep.subr.mxu0 0.0
        %1507 = vmatpush2.msra.mxu0 0.0
        %1508 = vmatprep.subr.mxu0 0.0
        %1509 = vmatpush2.msra.mxu0 0.0
        %1510 = vmatprep.mubr.f32.mxu0 0.0
        %1511 = vmatmul.mubr.f32.gmra.mxu0 %v1261
        %v1512 = vpop.f32.mrf.mxu0
        %v1513 = vadd.f32 0.0, %v1512
        %v1514 = vpop.f32.mrf.mxu0
        %1515 = vmatprep.mubr.f32.mxu0 0.0
        %1516 = vmatmul.mubr.f32.gmra.mxu0 %v1262
        %v1517 = vpop.f32.mrf.mxu0
        %v1518 = vadd.f32 0.0, %v1517
        %v1519 = vpop.f32.mrf.mxu0
        %1520 = vmatprep.mubr.f32.mxu0 0.0
        %1521 = vmatmul.mubr.f32.gmra.mxu0 %v1263
        %v1522 = vpop.f32.mrf.mxu0
        %v1523 = vadd.f32 0.0, %v1522
        %v1524 = vpop.f32.mrf.mxu0
        %1525 = vmatprep.mubr.f32.mxu0 0.0
        %1526 = vmatmul.mubr.f32.gmra.mxu0 %v1264
        %v1527 = vpop.f32.mrf.mxu0
        %v1528 = vadd.f32 0.0, %v1527
        %v1529 = vpop.f32.mrf.mxu0
        %1530 = vmatprep.mubr.f32.mxu0 0.0
        %1531 = vmatmul.mubr.f32.gmra.mxu0 %v1265
        %v1532 = vpop.f32.mrf.mxu0
        %v1533 = vadd.f32 0.0, %v1532
        %v1534 = vpop.f32.mrf.mxu0
        %1535 = vmatprep.mubr.f32.mxu0 0.0
        %1536 = vmatmul.mubr.f32.gmra.mxu0 %v1266
        %v1537 = vpop.f32.mrf.mxu0
        %v1538 = vadd.f32 0.0, %v1537
        %v1539 = vpop.f32.mrf.mxu0
        %1540 = vmatprep.mubr.f32.mxu0 0.0
        %1541 = vmatmul.mubr.f32.gmra.mxu0 %v1267
        %v1542 = vpop.f32.mrf.mxu0
        %v1543 = vadd.f32 0.0, %v1542
        %v1544 = vpop.f32.mrf.mxu0
        %1545 = vmatprep.mubr.f32.mxu0 0.0
        %1546 = vmatmul.mubr.f32.gmra.mxu0 %v1268
        %v1547 = vpop.f32.mrf.mxu0
        %v1548 = vadd.f32 0.0, %v1547
        %v1549 = vpop.f32.mrf.mxu0
        %1550 = vmatprep.mubr.f32.mxu0 0.0
        %1551 = vmatmul.mubr.f32.gmra.mxu0 %v1269
        %v1552 = vpop.f32.mrf.mxu0
        %v1553 = vadd.f32 0.0, %v1552
        %v1554 = vpop.f32.mrf.mxu0
        %1555 = vmatprep.mubr.f32.mxu0 0.0
        %1556 = vmatmul.mubr.f32.gmra.mxu0 %v1270
        %v1557 = vpop.f32.mrf.mxu0
        %v1558 = vadd.f32 0.0, %v1557
        %v1559 = vpop.f32.mrf.mxu0
        %1560 = vmatprep.mubr.f32.mxu0 0.0
        %1561 = vmatmul.mubr.f32.gmra.mxu0 %v1271
        %v1562 = vpop.f32.mrf.mxu0
        %v1563 = vadd.f32 0.0, %v1562
        %v1564 = vpop.f32.mrf.mxu0
        %1565 = vmatprep.mubr.f32.mxu0 0.0
        %1566 = vmatmul.mubr.f32.gmra.mxu0 %v1272
        %v1567 = vpop.f32.mrf.mxu0
        %v1568 = vadd.f32 0.0, %v1567
        %v1569 = vpop.f32.mrf.mxu0
        %1570 = vmatprep.mubr.f32.mxu0 0.0
        %1571 = vmatmul.mubr.f32.gmra.mxu0 %v1273
        %v1572 = vpop.f32.mrf.mxu0
        %v1573 = vadd.f32 0.0, %v1572
        %v1574 = vpop.f32.mrf.mxu0
        %1575 = vmatprep.mubr.f32.mxu0 0.0
        %1576 = vmatmul.mubr.f32.gmra.mxu0 %v1274
        %v1577 = vpop.f32.mrf.mxu0
        %v1578 = vadd.f32 0.0, %v1577
        %v1579 = vpop.f32.mrf.mxu0
        %1580 = vmatprep.mubr.f32.mxu0 0.0
        %1581 = vmatmul.mubr.f32.gmra.mxu0 %v1275
        %v1582 = vpop.f32.mrf.mxu0
        %v1583 = vadd.f32 0.0, %v1582
        %v1584 = vpop.f32.mrf.mxu0
        %1585 = vmatprep.mubr.f32.mxu0 0.0
        %1586 = vmatmul.mubr.f32.gmra.mxu0 %v1276
        %v1587 = vpop.f32.mrf.mxu0
        %v1588 = vadd.f32 0.0, %v1587
        %v1589 = vpop.f32.mrf.mxu0
        %1590 = vdwg.mxu0
        %1591 = vmatprep.subr.mxu0 0.0
        %1592 = vmatpush1.msra.mxu0 %v1429
        %1593 = vmatprep.subr.mxu0 0.0
        %1594 = vmatpush1.msra.mxu0 %v1428
        %1595 = vmatprep.subr.mxu0 0.0
        %1596 = vmatpush1.msra.mxu0 %v1427
        %1597 = vmatprep.subr.mxu0 0.0
        %1598 = vmatpush1.msra.mxu0 %v1426
        %1599 = vmatprep.subr.mxu0 0.0
        %1600 = vmatpush1.msra.mxu0 %v1425
        %1601 = vmatprep.subr.mxu0 0.0
        %1602 = vmatpush1.msra.mxu0 %v1424
        %1603 = vmatprep.subr.mxu0 0.0
        %1604 = vmatpush1.msra.mxu0 %v1423
        %1605 = vmatprep.subr.mxu0 0.0
        %1606 = vmatpush1.msra.mxu0 %v1422
        %1607 = vmatprep.subr.mxu0 0.0
        %1608 = vmatpush1.msra.mxu0 %v1421
        %1609 = vmatprep.subr.mxu0 0.0
        %1610 = vmatpush1.msra.mxu0 %v1420
        %1611 = vmatprep.subr.mxu0 0.0
        %1612 = vmatpush1.msra.mxu0 %v1419
        %1613 = vmatprep.subr.mxu0 0.0
        %1614 = vmatpush1.msra.mxu0 %v1418
        %1615 = vmatprep.subr.mxu0 0.0
        %1616 = vmatpush1.msra.mxu0 %v1417
        %1617 = vmatprep.subr.mxu0 0.0
        %1618 = vmatpush1.msra.mxu0 %v1416
        %1619 = vmatprep.subr.mxu0 0.0
        %1620 = vmatpush1.msra.mxu0 %v1415
        %1621 = vmatprep.subr.mxu0 0.0
        %1622 = vmatpush1.msra.mxu0 %v1414
        %1623 = vmatprep.subr.mxu0 0.0
        %1624 = vmatpush2.msra.mxu0 0.0
        %1625 = vmatprep.subr.mxu0 0.0
        %1626 = vmatpush2.msra.mxu0 0.0
        %1627 = vmatprep.subr.mxu0 0.0
        %1628 = vmatpush2.msra.mxu0 0.0
        %1629 = vmatprep.subr.mxu0 0.0
        %1630 = vmatpush2.msra.mxu0 0.0
        %1631 = vmatprep.subr.mxu0 0.0
        %1632 = vmatpush2.msra.mxu0 0.0
        %1633 = vmatprep.subr.mxu0 0.0
        %1634 = vmatpush2.msra.mxu0 0.0
        %1635 = vmatprep.subr.mxu0 0.0
        %1636 = vmatpush2.msra.mxu0 0.0
        %1637 = vmatprep.subr.mxu0 0.0
        %1638 = vmatpush2.msra.mxu0 0.0
        %1639 = vmatprep.subr.mxu0 0.0
        %1640 = vmatpush2.msra.mxu0 0.0
        %1641 = vmatprep.subr.mxu0 0.0
        %1642 = vmatpush2.msra.mxu0 0.0
        %1643 = vmatprep.subr.mxu0 0.0
        %1644 = vmatpush2.msra.mxu0 0.0
        %1645 = vmatprep.subr.mxu0 0.0
        %1646 = vmatpush2.msra.mxu0 0.0
        %1647 = vmatprep.subr.mxu0 0.0
        %1648 = vmatpush2.msra.mxu0 0.0
        %1649 = vmatprep.subr.mxu0 0.0
        %1650 = vmatpush2.msra.mxu0 0.0
        %1651 = vmatprep.subr.mxu0 0.0
        %1652 = vmatpush2.msra.mxu0 0.0
        %1653 = vmatprep.subr.mxu0 0.0
        %1654 = vmatpush2.msra.mxu0 0.0
        %1655 = vmatprep.mubr.f32.mxu0 0.0
        %1656 = vmatmul.mubr.f32.gmra.mxu0 %v1352
        %v1657 = vpop.f32.mrf.mxu0
        %v1658 = vadd.f32 %v1513, %v1657
        %v1659 = vpop.f32.mrf.mxu0
        %1660 = vmatprep.mubr.f32.mxu0 0.0
        %1661 = vmatmul.mubr.f32.gmra.mxu0 %v1355
        %v1662 = vpop.f32.mrf.mxu0
        %v1663 = vadd.f32 %v1518, %v1662
        %v1664 = vpop.f32.mrf.mxu0
        %1665 = vmatprep.mubr.f32.mxu0 0.0
        %1666 = vmatmul.mubr.f32.gmra.mxu0 %v1360
        %v1667 = vpop.f32.mrf.mxu0
        %v1668 = vadd.f32 %v1523, %v1667
        %v1669 = vpop.f32.mrf.mxu0
        %1670 = vmatprep.mubr.f32.mxu0 0.0
        %1671 = vmatmul.mubr.f32.gmra.mxu0 %v1363
        %v1672 = vpop.f32.mrf.mxu0
        %v1673 = vadd.f32 %v1528, %v1672
        %v1674 = vpop.f32.mrf.mxu0
        %1675 = vmatprep.mubr.f32.mxu0 0.0
        %1676 = vmatmul.mubr.f32.gmra.mxu0 %v1368
        %v1677 = vpop.f32.mrf.mxu0
        %v1678 = vadd.f32 %v1533, %v1677
        %v1679 = vpop.f32.mrf.mxu0
        %1680 = vmatprep.mubr.f32.mxu0 0.0
        %1681 = vmatmul.mubr.f32.gmra.mxu0 %v1371
        %v1682 = vpop.f32.mrf.mxu0
        %v1683 = vadd.f32 %v1538, %v1682
        %v1684 = vpop.f32.mrf.mxu0
        %1685 = vmatprep.mubr.f32.mxu0 0.0
        %1686 = vmatmul.mubr.f32.gmra.mxu0 %v1376
        %v1687 = vpop.f32.mrf.mxu0
        %v1688 = vadd.f32 %v1543, %v1687
        %v1689 = vpop.f32.mrf.mxu0
        %1690 = vmatprep.mubr.f32.mxu0 0.0
        %1691 = vmatmul.mubr.f32.gmra.mxu0 %v1379
        %v1692 = vpop.f32.mrf.mxu0
        %v1693 = vadd.f32 %v1548, %v1692
        %v1694 = vpop.f32.mrf.mxu0
        %1695 = vmatprep.mubr.f32.mxu0 0.0
        %1696 = vmatmul.mubr.f32.gmra.mxu0 %v1384
        %v1697 = vpop.f32.mrf.mxu0
        %v1698 = vadd.f32 %v1553, %v1697
        %v1699 = vpop.f32.mrf.mxu0
        %1700 = vmatprep.mubr.f32.mxu0 0.0
        %1701 = vmatmul.mubr.f32.gmra.mxu0 %v1387
        %v1702 = vpop.f32.mrf.mxu0
        %v1703 = vadd.f32 %v1558, %v1702
        %v1704 = vpop.f32.mrf.mxu0
        %1705 = vmatprep.mubr.f32.mxu0 0.0
        %1706 = vmatmul.mubr.f32.gmra.mxu0 %v1392
        %v1707 = vpop.f32.mrf.mxu0
        %v1708 = vadd.f32 %v1563, %v1707
        %v1709 = vpop.f32.mrf.mxu0
        %1710 = vmatprep.mubr.f32.mxu0 0.0
        %1711 = vmatmul.mubr.f32.gmra.mxu0 %v1395
        %v1712 = vpop.f32.mrf.mxu0
        %v1713 = vadd.f32 %v1568, %v1712
        %v1714 = vpop.f32.mrf.mxu0
        %1715 = vmatprep.mubr.f32.mxu0 0.0
        %1716 = vmatmul.mubr.f32.gmra.mxu0 %v1400
        %v1717 = vpop.f32.mrf.mxu0
        %v1718 = vadd.f32 %v1573, %v1717
        %v1719 = vpop.f32.mrf.mxu0
        %1720 = vmatprep.mubr.f32.mxu0 0.0
        %1721 = vmatmul.mubr.f32.gmra.mxu0 %v1403
        %v1722 = vpop.f32.mrf.mxu0
        %v1723 = vadd.f32 %v1578, %v1722
        %v1724 = vpop.f32.mrf.mxu0
        %1725 = vmatprep.mubr.f32.mxu0 0.0
        %1726 = vmatmul.mubr.f32.gmra.mxu0 %v1408
        %v1727 = vpop.f32.mrf.mxu0
        %v1728 = vadd.f32 %v1583, %v1727
        %v1729 = vpop.f32.mrf.mxu0
        %1730 = vmatprep.mubr.f32.mxu0 0.0
        %1731 = vmatmul.mubr.f32.gmra.mxu0 %v1411
        %v1732 = vpop.f32.mrf.mxu0
        %v1733 = vadd.f32 %v1588, %v1732
        %v1734 = vpop.f32.mrf.mxu0
        %1735 = vdwg.mxu0
        %v1736 = vlaneseq
        %v1737 = vshrl.u32 %v1736, 7
        %v1738 = vsub.s32 3, %v1737
        %v1739 = vrot.slane %v676, %v1738
        %v1740 = vadd.f32 %v1658, %v1739
        %v1741 = vadd.f32 %v1663, %v1739
        %v1742 = vadd.f32 %v1668, %v1739
        %v1743 = vadd.f32 %v1673, %v1739
        %v1744 = vadd.f32 %v1678, %v1739
        %v1745 = vadd.f32 %v1683, %v1739
        %v1746 = vadd.f32 %v1688, %v1739
        %v1747 = vadd.f32 %v1693, %v1739
        %v1748 = vadd.f32 %v1698, %v1739
        %v1749 = vadd.f32 %v1703, %v1739
        %v1750 = vadd.f32 %v1708, %v1739
        %v1751 = vadd.f32 %v1713, %v1739
        %v1752 = vadd.f32 %v1718, %v1739
        %v1753 = vadd.f32 %v1723, %v1739
        %v1754 = vadd.f32 %v1728, %v1739
        %v1755 = vadd.f32 %v1733, %v1739
        %vm1756 = vcmp.ge.f32.partialorder %v1740, 0.0
        %vm1757 = vcmp.ge.f32.partialorder %v1741, 0.0
        %vm1758 = vcmp.ge.f32.partialorder %v1742, 0.0
        %vm1759 = vcmp.ge.f32.partialorder %v1743, 0.0
        %vm1760 = vcmp.ge.f32.partialorder %v1744, 0.0
        %vm1761 = vcmp.ge.f32.partialorder %v1745, 0.0
        %vm1762 = vcmp.ge.f32.partialorder %v1746, 0.0
        %vm1763 = vcmp.ge.f32.partialorder %v1747, 0.0
        %vm1764 = vcmp.ge.f32.partialorder %v1748, 0.0
        %vm1765 = vcmp.ge.f32.partialorder %v1749, 0.0
        %vm1766 = vcmp.ge.f32.partialorder %v1750, 0.0
        %vm1767 = vcmp.ge.f32.partialorder %v1751, 0.0
        %vm1768 = vcmp.ge.f32.partialorder %v1752, 0.0
        %vm1769 = vcmp.ge.f32.partialorder %v1753, 0.0
        %vm1770 = vcmp.ge.f32.partialorder %v1754, 0.0
        %vm1771 = vcmp.ge.f32.partialorder %v1755, 0.0
        %v1772 = vmul.f32 %v1740, 0.01
        %v1773 = vmul.f32 %v1741, 0.01
        %v1774 = vmul.f32 %v1742, 0.01
        %v1775 = vmul.f32 %v1743, 0.01
        %v1776 = vmul.f32 %v1744, 0.01
        %v1777 = vmul.f32 %v1745, 0.01
        %v1778 = vmul.f32 %v1746, 0.01
        %v1779 = vmul.f32 %v1747, 0.01
        %v1780 = vmul.f32 %v1748, 0.01
        %v1781 = vmul.f32 %v1749, 0.01
        %v1782 = vmul.f32 %v1750, 0.01
        %v1783 = vmul.f32 %v1751, 0.01
        %v1784 = vmul.f32 %v1752, 0.01
        %v1785 = vmul.f32 %v1753, 0.01
        %v1786 = vmul.f32 %v1754, 0.01
        %v1787 = vmul.f32 %v1755, 0.01
        %v1788 = vsel %vm1756, %v1740, %v1772
        %v1789 = vsel %vm1757, %v1741, %v1773
        %v1790 = vsel %vm1758, %v1742, %v1774
        %v1791 = vsel %vm1759, %v1743, %v1775
        %v1792 = vsel %vm1760, %v1744, %v1776
        %v1793 = vsel %vm1761, %v1745, %v1777
        %v1794 = vsel %vm1762, %v1746, %v1778
        %v1795 = vsel %vm1763, %v1747, %v1779
        %v1796 = vsel %vm1764, %v1748, %v1780
        %v1797 = vsel %vm1765, %v1749, %v1781
        %v1798 = vsel %vm1766, %v1750, %v1782
        %v1799 = vsel %vm1767, %v1751, %v1783
        %v1800 = vsel %vm1768, %v1752, %v1784
        %v1801 = vsel %vm1769, %v1753, %v1785
        %v1802 = vsel %vm1770, %v1754, %v1786
        %v1803 = vsel %vm1771, %v1755, %v1787
        %v1804 = vlaneseq
        %v1805 = vshrl.u32 %v1804, 7
        %v1806 = vsub.s32 4, %v1805
        %v1807 = vrot.slane %v676, %v1806
        %v1808 = vmul.f32 %v1788, %v1807
        %v1809 = vmul.f32 %v1789, %v1807
        %v1810 = vmul.f32 %v1790, %v1807
        %v1811 = vmul.f32 %v1791, %v1807
        %v1812 = vmul.f32 %v1792, %v1807
        %v1813 = vmul.f32 %v1793, %v1807
        %v1814 = vmul.f32 %v1794, %v1807
        %v1815 = vmul.f32 %v1795, %v1807
        %v1816 = vmul.f32 %v1796, %v1807
        %v1817 = vmul.f32 %v1797, %v1807
        %v1818 = vmul.f32 %v1798, %v1807
        %v1819 = vmul.f32 %v1799, %v1807
        %v1820 = vmul.f32 %v1800, %v1807
        %v1821 = vmul.f32 %v1801, %v1807
        %v1822 = vmul.f32 %v1802, %v1807
        %v1823 = vmul.f32 %v1803, %v1807
        %v1824 = vlaneseq
        %v1825 = vshrl.u32 %v1824, 7
        %v1826 = vsub.s32 5, %v1825
        %v1827 = vrot.slane %v676, %v1826
        %v1828 = vadd.f32 %v1808, %v1827
        %v1829 = vadd.f32 %v1809, %v1827
        %v1830 = vadd.f32 %v1810, %v1827
        %v1831 = vadd.f32 %v1811, %v1827
        %v1832 = vadd.f32 %v1812, %v1827
        %v1833 = vadd.f32 %v1813, %v1827
        %v1834 = vadd.f32 %v1814, %v1827
        %v1835 = vadd.f32 %v1815, %v1827
        %v1836 = vadd.f32 %v1816, %v1827
        %v1837 = vadd.f32 %v1817, %v1827
        %v1838 = vadd.f32 %v1818, %v1827
        %v1839 = vadd.f32 %v1819, %v1827
        %v1840 = vadd.f32 %v1820, %v1827
        %v1841 = vadd.f32 %v1821, %v1827
        %v1842 = vadd.f32 %v1822, %v1827
        %v1843 = vadd.f32 %v1823, %v1827
        %v1844 = vld [vmem:[%s658] sm:$0xff]
        %v1845 = vld [vmem:[%s658 + $0x8] sm:$0xff]
        %v1846 = vld [vmem:[%s658 + $0x10] sm:$0xff]
        %v1847 = vld [vmem:[%s658 + $0x18] sm:$0xff]
        %v1848 = vld [vmem:[%s658 + $0x20] sm:$0xff]
        %v1849 = vld [vmem:[%s658 + $0x28] sm:$0xff]
        %v1850 = vld [vmem:[%s658 + $0x30] sm:$0xff]
        %v1851 = vld [vmem:[%s658 + $0x38] sm:$0xff]
        %v1852 = vld [vmem:[%s658 + $0x40] sm:$0xff]
        %v1853 = vld [vmem:[%s658 + $0x48] sm:$0xff]
        %v1854 = vld [vmem:[%s658 + $0x50] sm:$0xff]
        %v1855 = vld [vmem:[%s658 + $0x58] sm:$0xff]
        %v1856 = vld [vmem:[%s658 + $0x60] sm:$0xff]
        %v1857 = vld [vmem:[%s658 + $0x68] sm:$0xff]
        %v1858 = vld [vmem:[%s658 + $0x70] sm:$0xff]
        %v1859 = vld [vmem:[%s658 + $0x78] sm:$0xff]
        %v1860 = vmul.f32 %v1828, 0.2
        %v1861 = vmul.f32 %v1829, 0.2
        %v1862 = vmul.f32 %v1830, 0.2
        %v1863 = vmul.f32 %v1831, 0.2
        %v1864 = vmul.f32 %v1832, 0.2
        %v1865 = vmul.f32 %v1833, 0.2
        %v1866 = vmul.f32 %v1834, 0.2
        %v1867 = vmul.f32 %v1835, 0.2
        %v1868 = vmul.f32 %v1836, 0.2
        %v1869 = vmul.f32 %v1837, 0.2
        %v1870 = vmul.f32 %v1838, 0.2
        %v1871 = vmul.f32 %v1839, 0.2
        %v1872 = vmul.f32 %v1840, 0.2
        %v1873 = vmul.f32 %v1841, 0.2
        %v1874 = vmul.f32 %v1842, 0.2
        %v1875 = vmul.f32 %v1843, 0.2
        %v1876 = vadd.f32 %v1844, %v1860
        %v1877 = vadd.f32 %v1845, %v1861
        %v1878 = vadd.f32 %v1846, %v1862
        %v1879 = vadd.f32 %v1847, %v1863
        %v1880 = vadd.f32 %v1848, %v1864
        %v1881 = vadd.f32 %v1849, %v1865
        %v1882 = vadd.f32 %v1850, %v1866
        %v1883 = vadd.f32 %v1851, %v1867
        %v1884 = vadd.f32 %v1852, %v1868
        %v1885 = vadd.f32 %v1853, %v1869
        %v1886 = vadd.f32 %v1854, %v1870
        %v1887 = vadd.f32 %v1855, %v1871
        %v1888 = vadd.f32 %v1856, %v1872
        %v1889 = vadd.f32 %v1857, %v1873
        %v1890 = vadd.f32 %v1858, %v1874
        %v1891 = vadd.f32 %v1859, %v1875
        %1892 = vst [vmem:[%s658] sm:$0xff] %v1876
        %1893 = vst [vmem:[%s658 + $0x8] sm:$0xff] %v1877
        %1894 = vst [vmem:[%s658 + $0x10] sm:$0xff] %v1878
        %1895 = vst [vmem:[%s658 + $0x18] sm:$0xff] %v1879
        %1896 = vst [vmem:[%s658 + $0x20] sm:$0xff] %v1880
        %1897 = vst [vmem:[%s658 + $0x28] sm:$0xff] %v1881
        %1898 = vst [vmem:[%s658 + $0x30] sm:$0xff] %v1882
        %1899 = vst [vmem:[%s658 + $0x38] sm:$0xff] %v1883
        %1900 = vst [vmem:[%s658 + $0x40] sm:$0xff] %v1884
        %1901 = vst [vmem:[%s658 + $0x48] sm:$0xff] %v1885
        %1902 = vst [vmem:[%s658 + $0x50] sm:$0xff] %v1886
        %1903 = vst [vmem:[%s658 + $0x58] sm:$0xff] %v1887
        %1904 = vst [vmem:[%s658 + $0x60] sm:$0xff] %v1888
        %1905 = vst [vmem:[%s658 + $0x68] sm:$0xff] %v1889
        %1906 = vst [vmem:[%s658 + $0x70] sm:$0xff] %v1890
        %1907 = vst [vmem:[%s658 + $0x78] sm:$0xff] %v1891
        %v1908 = vpack.c.bf16 %v1829, %v1828
        %v1909 = vpack.c.bf16 %v1831, %v1830
        %v1910 = vpack.c.bf16 %v1833, %v1832
        %v1911 = vpack.c.bf16 %v1835, %v1834
        %v1912 = vpack.c.bf16 %v1837, %v1836
        %v1913 = vpack.c.bf16 %v1839, %v1838
        %v1914 = vpack.c.bf16 %v1841, %v1840
        %v1915 = vpack.c.bf16 %v1843, %v1842
        %1916 = vmatprep.subr.bf16.mxu0 0
        %1917 = vmatpush1.bf16.msra.mxu0 %v1915
        %1918 = vmatprep.subr.bf16.mxu0 0
        %1919 = vmatpush1.bf16.msra.mxu0 %v1914
        %1920 = vmatprep.subr.bf16.mxu0 0
        %1921 = vmatpush1.bf16.msra.mxu0 %v1913
        %1922 = vmatprep.subr.bf16.mxu0 0
        %1923 = vmatpush1.bf16.msra.mxu0 %v1912
        %1924 = vmatprep.subr.bf16.mxu0 0
        %1925 = vmatpush1.bf16.msra.mxu0 %v1911
        %1926 = vmatprep.subr.bf16.mxu0 0
        %1927 = vmatpush1.bf16.msra.mxu0 %v1910
        %1928 = vmatprep.subr.bf16.mxu0 0
        %1929 = vmatpush1.bf16.msra.mxu0 %v1909
        %1930 = vmatprep.subr.bf16.mxu0 0
        %1931 = vmatpush1.bf16.msra.mxu0 %v1908
        %1932 = vmatprep.subr.bf16.mxu0 0
        %1933 = vmatpush2.bf16.msra.mxu0 0
        %1934 = vmatprep.subr.bf16.mxu0 0
        %1935 = vmatpush2.bf16.msra.mxu0 0
        %1936 = vmatprep.subr.bf16.mxu0 0
        %1937 = vmatpush2.bf16.msra.mxu0 0
        %1938 = vmatprep.subr.bf16.mxu0 0
        %1939 = vmatpush2.bf16.msra.mxu0 0
        %1940 = vmatprep.subr.bf16.mxu0 0
        %1941 = vmatpush2.bf16.msra.mxu0 0
        %1942 = vmatprep.subr.bf16.mxu0 0
        %1943 = vmatpush2.bf16.msra.mxu0 0
        %1944 = vmatprep.subr.bf16.mxu0 0
        %1945 = vmatpush2.bf16.msra.mxu0 0
        %1946 = vmatprep.subr.bf16.mxu0 0
        %1947 = vmatpush2.bf16.msra.mxu0 0
        %1948 = vmatprep.mubr.bf16.mxu0 0
        %1949 = vmatmul.mubr.bf16.gmra.mxu0 %v734
        %v1950 = vpop.f32.mrf.mxu0
        %v1951 = vadd.f32 0.0, %v1950
        %v1952 = vpop.f32.mrf.mxu0
        %v1953 = vpop.f32.mrf.mxu0
        %v1954 = vadd.f32 0.0, %v1953
        %v1955 = vpop.f32.mrf.mxu0
        %1956 = vmatprep.mubr.bf16.mxu0 0
        %1957 = vmatmul.mubr.bf16.gmra.mxu0 %v735
        %v1958 = vpop.f32.mrf.mxu0
        %v1959 = vadd.f32 0.0, %v1958
        %v1960 = vpop.f32.mrf.mxu0
        %v1961 = vpop.f32.mrf.mxu0
        %v1962 = vadd.f32 0.0, %v1961
        %v1963 = vpop.f32.mrf.mxu0
        %1964 = vmatprep.mubr.bf16.mxu0 0
        %1965 = vmatmul.mubr.bf16.gmra.mxu0 %v736
        %v1966 = vpop.f32.mrf.mxu0
        %v1967 = vadd.f32 0.0, %v1966
        %v1968 = vpop.f32.mrf.mxu0
        %v1969 = vpop.f32.mrf.mxu0
        %v1970 = vadd.f32 0.0, %v1969
        %v1971 = vpop.f32.mrf.mxu0
        %1972 = vmatprep.mubr.bf16.mxu0 0
        %1973 = vmatmul.mubr.bf16.gmra.mxu0 %v737
        %v1974 = vpop.f32.mrf.mxu0
        %v1975 = vadd.f32 0.0, %v1974
        %v1976 = vpop.f32.mrf.mxu0
        %v1977 = vpop.f32.mrf.mxu0
        %v1978 = vadd.f32 0.0, %v1977
        %v1979 = vpop.f32.mrf.mxu0
        %1980 = vmatprep.mubr.bf16.mxu0 0
        %1981 = vmatmul.mubr.bf16.gmra.mxu0 %v738
        %v1982 = vpop.f32.mrf.mxu0
        %v1983 = vadd.f32 0.0, %v1982
        %v1984 = vpop.f32.mrf.mxu0
        %v1985 = vpop.f32.mrf.mxu0
        %v1986 = vadd.f32 0.0, %v1985
        %v1987 = vpop.f32.mrf.mxu0
        %1988 = vmatprep.mubr.bf16.mxu0 0
        %1989 = vmatmul.mubr.bf16.gmra.mxu0 %v739
        %v1990 = vpop.f32.mrf.mxu0
        %v1991 = vadd.f32 0.0, %v1990
        %v1992 = vpop.f32.mrf.mxu0
        %v1993 = vpop.f32.mrf.mxu0
        %v1994 = vadd.f32 0.0, %v1993
        %v1995 = vpop.f32.mrf.mxu0
        %1996 = vmatprep.mubr.bf16.mxu0 0
        %1997 = vmatmul.mubr.bf16.gmra.mxu0 %v740
        %v1998 = vpop.f32.mrf.mxu0
        %v1999 = vadd.f32 0.0, %v1998
        %v2000 = vpop.f32.mrf.mxu0
        %v2001 = vpop.f32.mrf.mxu0
        %v2002 = vadd.f32 0.0, %v2001
        %v2003 = vpop.f32.mrf.mxu0
        %2004 = vmatprep.mubr.bf16.mxu0 0
        %2005 = vmatmul.mubr.bf16.gmra.mxu0 %v741
        %v2006 = vpop.f32.mrf.mxu0
        %v2007 = vadd.f32 0.0, %v2006
        %v2008 = vpop.f32.mrf.mxu0
        %v2009 = vpop.f32.mrf.mxu0
        %v2010 = vadd.f32 0.0, %v2009
        %v2011 = vpop.f32.mrf.mxu0
        %2012 = vdwg.mxu0
        %v2013 = vld [vmem:[%s566] sm:$0xff]
        %v2014 = vld [vmem:[%s566 + $0x8] sm:$0xff]
        %v2015 = vld [vmem:[%s566 + $0x10] sm:$0xff]
        %v2016 = vld [vmem:[%s566 + $0x18] sm:$0xff]
        %v2017 = vld [vmem:[%s566 + $0x20] sm:$0xff]
        %v2018 = vld [vmem:[%s566 + $0x28] sm:$0xff]
        %v2019 = vld [vmem:[%s566 + $0x30] sm:$0xff]
        %v2020 = vld [vmem:[%s566 + $0x38] sm:$0xff]
        %v2021 = vld [vmem:[%s566 + $0x40] sm:$0xff]
        %v2022 = vld [vmem:[%s566 + $0x48] sm:$0xff]
        %v2023 = vld [vmem:[%s566 + $0x50] sm:$0xff]
        %v2024 = vld [vmem:[%s566 + $0x58] sm:$0xff]
        %v2025 = vld [vmem:[%s566 + $0x60] sm:$0xff]
        %v2026 = vld [vmem:[%s566 + $0x68] sm:$0xff]
        %v2027 = vld [vmem:[%s566 + $0x70] sm:$0xff]
        %v2028 = vld [vmem:[%s566 + $0x78] sm:$0xff]
        %v2029 = vld [vmem:[%s575] sm:$0xff]
        %v2030 = vld [vmem:[%s575 + $0x8] sm:$0xff]
        %v2031 = vld [vmem:[%s575 + $0x10] sm:$0xff]
        %v2032 = vld [vmem:[%s575 + $0x18] sm:$0xff]
        %v2033 = vld [vmem:[%s575 + $0x20] sm:$0xff]
        %v2034 = vld [vmem:[%s575 + $0x28] sm:$0xff]
        %v2035 = vld [vmem:[%s575 + $0x30] sm:$0xff]
        %v2036 = vld [vmem:[%s575 + $0x38] sm:$0xff]
        %v2037 = vld [vmem:[%s575 + $0x40] sm:$0xff]
        %v2038 = vld [vmem:[%s575 + $0x48] sm:$0xff]
        %v2039 = vld [vmem:[%s575 + $0x50] sm:$0xff]
        %v2040 = vld [vmem:[%s575 + $0x58] sm:$0xff]
        %v2041 = vld [vmem:[%s575 + $0x60] sm:$0xff]
        %v2042 = vld [vmem:[%s575 + $0x68] sm:$0xff]
        %v2043 = vld [vmem:[%s575 + $0x70] sm:$0xff]
        %v2044 = vld [vmem:[%s575 + $0x78] sm:$0xff]
        %2045 = vmatprep.subr.mxu0 0.0
        %2046 = vmatpush1.msra.mxu0 %v2044
        %2047 = vmatprep.subr.mxu0 0.0
        %2048 = vmatpush1.msra.mxu0 %v2043
        %2049 = vmatprep.subr.mxu0 0.0
        %2050 = vmatpush1.msra.mxu0 %v2042
        %2051 = vmatprep.subr.mxu0 0.0
        %2052 = vmatpush1.msra.mxu0 %v2041
        %2053 = vmatprep.subr.mxu0 0.0
        %2054 = vmatpush1.msra.mxu0 %v2040
        %2055 = vmatprep.subr.mxu0 0.0
        %2056 = vmatpush1.msra.mxu0 %v2039
        %2057 = vmatprep.subr.mxu0 0.0
        %2058 = vmatpush1.msra.mxu0 %v2038
        %2059 = vmatprep.subr.mxu0 0.0
        %2060 = vmatpush1.msra.mxu0 %v2037
        %2061 = vmatprep.subr.mxu0 0.0
        %2062 = vmatpush1.msra.mxu0 %v2036
        %2063 = vmatprep.subr.mxu0 0.0
        %2064 = vmatpush1.msra.mxu0 %v2035
        %2065 = vmatprep.subr.mxu0 0.0
        %2066 = vmatpush1.msra.mxu0 %v2034
        %2067 = vmatprep.subr.mxu0 0.0
        %2068 = vmatpush1.msra.mxu0 %v2033
        %2069 = vmatprep.subr.mxu0 0.0
        %2070 = vmatpush1.msra.mxu0 %v2032
        %2071 = vmatprep.subr.mxu0 0.0
        %2072 = vmatpush1.msra.mxu0 %v2031
        %2073 = vmatprep.subr.mxu0 0.0
        %2074 = vmatpush1.msra.mxu0 %v2030
        %2075 = vmatprep.subr.mxu0 0.0
        %2076 = vmatpush1.msra.mxu0 %v2029
        %2077 = vmatprep.subr.mxu0 0.0
        %2078 = vmatpush2.msra.mxu0 0.0
        %2079 = vmatprep.subr.mxu0 0.0
        %2080 = vmatpush2.msra.mxu0 0.0
        %2081 = vmatprep.subr.mxu0 0.0
        %2082 = vmatpush2.msra.mxu0 0.0
        %2083 = vmatprep.subr.mxu0 0.0
        %2084 = vmatpush2.msra.mxu0 0.0
        %2085 = vmatprep.subr.mxu0 0.0
        %2086 = vmatpush2.msra.mxu0 0.0
        %2087 = vmatprep.subr.mxu0 0.0
        %2088 = vmatpush2.msra.mxu0 0.0
        %2089 = vmatprep.subr.mxu0 0.0
        %2090 = vmatpush2.msra.mxu0 0.0
        %2091 = vmatprep.subr.mxu0 0.0
        %2092 = vmatpush2.msra.mxu0 0.0
        %2093 = vmatprep.subr.mxu0 0.0
        %2094 = vmatpush2.msra.mxu0 0.0
        %2095 = vmatprep.subr.mxu0 0.0
        %2096 = vmatpush2.msra.mxu0 0.0
        %2097 = vmatprep.subr.mxu0 0.0
        %2098 = vmatpush2.msra.mxu0 0.0
        %2099 = vmatprep.subr.mxu0 0.0
        %2100 = vmatpush2.msra.mxu0 0.0
        %2101 = vmatprep.subr.mxu0 0.0
        %2102 = vmatpush2.msra.mxu0 0.0
        %2103 = vmatprep.subr.mxu0 0.0
        %2104 = vmatpush2.msra.mxu0 0.0
        %2105 = vmatprep.subr.mxu0 0.0
        %2106 = vmatpush2.msra.mxu0 0.0
        %2107 = vmatprep.subr.mxu0 0.0
        %2108 = vmatpush2.msra.mxu0 0.0
        %2109 = vmatprep.mubr.f32.mxu0 0.0
        %2110 = vmatmul.mubr.f32.gmra.mxu0 %v1828
        %v2111 = vpop.f32.mrf.mxu0
        %v2112 = vadd.f32 0.0, %v2111
        %v2113 = vpop.f32.mrf.mxu0
        %2114 = vmatprep.mubr.f32.mxu0 0.0
        %2115 = vmatmul.mubr.f32.gmra.mxu0 %v1829
        %v2116 = vpop.f32.mrf.mxu0
        %v2117 = vadd.f32 0.0, %v2116
        %v2118 = vpop.f32.mrf.mxu0
        %2119 = vmatprep.mubr.f32.mxu0 0.0
        %2120 = vmatmul.mubr.f32.gmra.mxu0 %v1830
        %v2121 = vpop.f32.mrf.mxu0
        %v2122 = vadd.f32 0.0, %v2121
        %v2123 = vpop.f32.mrf.mxu0
        %2124 = vmatprep.mubr.f32.mxu0 0.0
        %2125 = vmatmul.mubr.f32.gmra.mxu0 %v1831
        %v2126 = vpop.f32.mrf.mxu0
        %v2127 = vadd.f32 0.0, %v2126
        %v2128 = vpop.f32.mrf.mxu0
        %2129 = vmatprep.mubr.f32.mxu0 0.0
        %2130 = vmatmul.mubr.f32.gmra.mxu0 %v1832
        %v2131 = vpop.f32.mrf.mxu0
        %v2132 = vadd.f32 0.0, %v2131
        %v2133 = vpop.f32.mrf.mxu0
        %2134 = vmatprep.mubr.f32.mxu0 0.0
        %2135 = vmatmul.mubr.f32.gmra.mxu0 %v1833
        %v2136 = vpop.f32.mrf.mxu0
        %v2137 = vadd.f32 0.0, %v2136
        %v2138 = vpop.f32.mrf.mxu0
        %2139 = vmatprep.mubr.f32.mxu0 0.0
        %2140 = vmatmul.mubr.f32.gmra.mxu0 %v1834
        %v2141 = vpop.f32.mrf.mxu0
        %v2142 = vadd.f32 0.0, %v2141
        %v2143 = vpop.f32.mrf.mxu0
        %2144 = vmatprep.mubr.f32.mxu0 0.0
        %2145 = vmatmul.mubr.f32.gmra.mxu0 %v1835
        %v2146 = vpop.f32.mrf.mxu0
        %v2147 = vadd.f32 0.0, %v2146
        %v2148 = vpop.f32.mrf.mxu0
        %2149 = vmatprep.mubr.f32.mxu0 0.0
        %2150 = vmatmul.mubr.f32.gmra.mxu0 %v1836
        %v2151 = vpop.f32.mrf.mxu0
        %v2152 = vadd.f32 0.0, %v2151
        %v2153 = vpop.f32.mrf.mxu0
        %2154 = vmatprep.mubr.f32.mxu0 0.0
        %2155 = vmatmul.mubr.f32.gmra.mxu0 %v1837
        %v2156 = vpop.f32.mrf.mxu0
        %v2157 = vadd.f32 0.0, %v2156
        %v2158 = vpop.f32.mrf.mxu0
        %2159 = vmatprep.mubr.f32.mxu0 0.0
        %2160 = vmatmul.mubr.f32.gmra.mxu0 %v1838
        %v2161 = vpop.f32.mrf.mxu0
        %v2162 = vadd.f32 0.0, %v2161
        %v2163 = vpop.f32.mrf.mxu0
        %2164 = vmatprep.mubr.f32.mxu0 0.0
        %2165 = vmatmul.mubr.f32.gmra.mxu0 %v1839
        %v2166 = vpop.f32.mrf.mxu0
        %v2167 = vadd.f32 0.0, %v2166
        %v2168 = vpop.f32.mrf.mxu0
        %2169 = vmatprep.mubr.f32.mxu0 0.0
        %2170 = vmatmul.mubr.f32.gmra.mxu0 %v1840
        %v2171 = vpop.f32.mrf.mxu0
        %v2172 = vadd.f32 0.0, %v2171
        %v2173 = vpop.f32.mrf.mxu0
        %2174 = vmatprep.mubr.f32.mxu0 0.0
        %2175 = vmatmul.mubr.f32.gmra.mxu0 %v1841
        %v2176 = vpop.f32.mrf.mxu0
        %v2177 = vadd.f32 0.0, %v2176
        %v2178 = vpop.f32.mrf.mxu0
        %2179 = vmatprep.mubr.f32.mxu0 0.0
        %2180 = vmatmul.mubr.f32.gmra.mxu0 %v1842
        %v2181 = vpop.f32.mrf.mxu0
        %v2182 = vadd.f32 0.0, %v2181
        %v2183 = vpop.f32.mrf.mxu0
        %2184 = vmatprep.mubr.f32.mxu0 0.0
        %2185 = vmatmul.mubr.f32.gmra.mxu0 %v1843
        %v2186 = vpop.f32.mrf.mxu0
        %v2187 = vadd.f32 0.0, %v2186
        %v2188 = vpop.f32.mrf.mxu0
        %2189 = vdwg.mxu0
        %2190 = vmatprep.subr.mxu0 0.0
        %2191 = vmatpush1.msra.mxu0 %v2028
        %2192 = vmatprep.subr.mxu0 0.0
        %2193 = vmatpush1.msra.mxu0 %v2027
        %2194 = vmatprep.subr.mxu0 0.0
        %2195 = vmatpush1.msra.mxu0 %v2026
        %2196 = vmatprep.subr.mxu0 0.0
        %2197 = vmatpush1.msra.mxu0 %v2025
        %2198 = vmatprep.subr.mxu0 0.0
        %2199 = vmatpush1.msra.mxu0 %v2024
        %2200 = vmatprep.subr.mxu0 0.0
        %2201 = vmatpush1.msra.mxu0 %v2023
        %2202 = vmatprep.subr.mxu0 0.0
        %2203 = vmatpush1.msra.mxu0 %v2022
        %2204 = vmatprep.subr.mxu0 0.0
        %2205 = vmatpush1.msra.mxu0 %v2021
        %2206 = vmatprep.subr.mxu0 0.0
        %2207 = vmatpush1.msra.mxu0 %v2020
        %2208 = vmatprep.subr.mxu0 0.0
        %2209 = vmatpush1.msra.mxu0 %v2019
        %2210 = vmatprep.subr.mxu0 0.0
        %2211 = vmatpush1.msra.mxu0 %v2018
        %2212 = vmatprep.subr.mxu0 0.0
        %2213 = vmatpush1.msra.mxu0 %v2017
        %2214 = vmatprep.subr.mxu0 0.0
        %2215 = vmatpush1.msra.mxu0 %v2016
        %2216 = vmatprep.subr.mxu0 0.0
        %2217 = vmatpush1.msra.mxu0 %v2015
        %2218 = vmatprep.subr.mxu0 0.0
        %2219 = vmatpush1.msra.mxu0 %v2014
        %2220 = vmatprep.subr.mxu0 0.0
        %2221 = vmatpush1.msra.mxu0 %v2013
        %2222 = vmatprep.subr.mxu0 0.0
        %2223 = vmatpush2.msra.mxu0 0.0
        %2224 = vmatprep.subr.mxu0 0.0
        %2225 = vmatpush2.msra.mxu0 0.0
        %2226 = vmatprep.subr.mxu0 0.0
        %2227 = vmatpush2.msra.mxu0 0.0
        %2228 = vmatprep.subr.mxu0 0.0
        %2229 = vmatpush2.msra.mxu0 0.0
        %2230 = vmatprep.subr.mxu0 0.0
        %2231 = vmatpush2.msra.mxu0 0.0
        %2232 = vmatprep.subr.mxu0 0.0
        %2233 = vmatpush2.msra.mxu0 0.0
        %2234 = vmatprep.subr.mxu0 0.0
        %2235 = vmatpush2.msra.mxu0 0.0
        %2236 = vmatprep.subr.mxu0 0.0
        %2237 = vmatpush2.msra.mxu0 0.0
        %2238 = vmatprep.subr.mxu0 0.0
        %2239 = vmatpush2.msra.mxu0 0.0
        %2240 = vmatprep.subr.mxu0 0.0
        %2241 = vmatpush2.msra.mxu0 0.0
        %2242 = vmatprep.subr.mxu0 0.0
        %2243 = vmatpush2.msra.mxu0 0.0
        %2244 = vmatprep.subr.mxu0 0.0
        %2245 = vmatpush2.msra.mxu0 0.0
        %2246 = vmatprep.subr.mxu0 0.0
        %2247 = vmatpush2.msra.mxu0 0.0
        %2248 = vmatprep.subr.mxu0 0.0
        %2249 = vmatpush2.msra.mxu0 0.0
        %2250 = vmatprep.subr.mxu0 0.0
        %2251 = vmatpush2.msra.mxu0 0.0
        %2252 = vmatprep.subr.mxu0 0.0
        %2253 = vmatpush2.msra.mxu0 0.0
        %2254 = vmatprep.mubr.f32.mxu0 0.0
        %2255 = vmatmul.mubr.f32.gmra.mxu0 %v1951
        %v2256 = vpop.f32.mrf.mxu0
        %v2257 = vadd.f32 %v2112, %v2256
        %v2258 = vpop.f32.mrf.mxu0
        %2259 = vmatprep.mubr.f32.mxu0 0.0
        %2260 = vmatmul.mubr.f32.gmra.mxu0 %v1954
        %v2261 = vpop.f32.mrf.mxu0
        %v2262 = vadd.f32 %v2117, %v2261
        %v2263 = vpop.f32.mrf.mxu0
        %2264 = vmatprep.mubr.f32.mxu0 0.0
        %2265 = vmatmul.mubr.f32.gmra.mxu0 %v1959
        %v2266 = vpop.f32.mrf.mxu0
        %v2267 = vadd.f32 %v2122, %v2266
        %v2268 = vpop.f32.mrf.mxu0
        %2269 = vmatprep.mubr.f32.mxu0 0.0
        %2270 = vmatmul.mubr.f32.gmra.mxu0 %v1962
        %v2271 = vpop.f32.mrf.mxu0
        %v2272 = vadd.f32 %v2127, %v2271
        %v2273 = vpop.f32.mrf.mxu0
        %2274 = vmatprep.mubr.f32.mxu0 0.0
        %2275 = vmatmul.mubr.f32.gmra.mxu0 %v1967
        %v2276 = vpop.f32.mrf.mxu0
        %v2277 = vadd.f32 %v2132, %v2276
        %v2278 = vpop.f32.mrf.mxu0
        %2279 = vmatprep.mubr.f32.mxu0 0.0
        %2280 = vmatmul.mubr.f32.gmra.mxu0 %v1970
        %v2281 = vpop.f32.mrf.mxu0
        %v2282 = vadd.f32 %v2137, %v2281
        %v2283 = vpop.f32.mrf.mxu0
        %2284 = vmatprep.mubr.f32.mxu0 0.0
        %2285 = vmatmul.mubr.f32.gmra.mxu0 %v1975
        %v2286 = vpop.f32.mrf.mxu0
        %v2287 = vadd.f32 %v2142, %v2286
        %v2288 = vpop.f32.mrf.mxu0
        %2289 = vmatprep.mubr.f32.mxu0 0.0
        %2290 = vmatmul.mubr.f32.gmra.mxu0 %v1978
        %v2291 = vpop.f32.mrf.mxu0
        %v2292 = vadd.f32 %v2147, %v2291
        %v2293 = vpop.f32.mrf.mxu0
        %2294 = vmatprep.mubr.f32.mxu0 0.0
        %2295 = vmatmul.mubr.f32.gmra.mxu0 %v1983
        %v2296 = vpop.f32.mrf.mxu0
        %v2297 = vadd.f32 %v2152, %v2296
        %v2298 = vpop.f32.mrf.mxu0
        %2299 = vmatprep.mubr.f32.mxu0 0.0
        %2300 = vmatmul.mubr.f32.gmra.mxu0 %v1986
        %v2301 = vpop.f32.mrf.mxu0
        %v2302 = vadd.f32 %v2157, %v2301
        %v2303 = vpop.f32.mrf.mxu0
        %2304 = vmatprep.mubr.f32.mxu0 0.0
        %2305 = vmatmul.mubr.f32.gmra.mxu0 %v1991
        %v2306 = vpop.f32.mrf.mxu0
        %v2307 = vadd.f32 %v2162, %v2306
        %v2308 = vpop.f32.mrf.mxu0
        %2309 = vmatprep.mubr.f32.mxu0 0.0
        %2310 = vmatmul.mubr.f32.gmra.mxu0 %v1994
        %v2311 = vpop.f32.mrf.mxu0
        %v2312 = vadd.f32 %v2167, %v2311
        %v2313 = vpop.f32.mrf.mxu0
        %2314 = vmatprep.mubr.f32.mxu0 0.0
        %2315 = vmatmul.mubr.f32.gmra.mxu0 %v1999
        %v2316 = vpop.f32.mrf.mxu0
        %v2317 = vadd.f32 %v2172, %v2316
        %v2318 = vpop.f32.mrf.mxu0
        %2319 = vmatprep.mubr.f32.mxu0 0.0
        %2320 = vmatmul.mubr.f32.gmra.mxu0 %v2002
        %v2321 = vpop.f32.mrf.mxu0
        %v2322 = vadd.f32 %v2177, %v2321
        %v2323 = vpop.f32.mrf.mxu0
        %2324 = vmatprep.mubr.f32.mxu0 0.0
        %2325 = vmatmul.mubr.f32.gmra.mxu0 %v2007
        %v2326 = vpop.f32.mrf.mxu0
        %v2327 = vadd.f32 %v2182, %v2326
        %v2328 = vpop.f32.mrf.mxu0
        %2329 = vmatprep.mubr.f32.mxu0 0.0
        %2330 = vmatmul.mubr.f32.gmra.mxu0 %v2010
        %v2331 = vpop.f32.mrf.mxu0
        %v2332 = vadd.f32 %v2187, %v2331
        %v2333 = vpop.f32.mrf.mxu0
        %2334 = vdwg.mxu0
        %v2335 = vlaneseq
        %v2336 = vshrl.u32 %v2335, 7
        %v2337 = vsub.s32 6, %v2336
        %v2338 = vrot.slane %v676, %v2337
        %v2339 = vadd.f32 %v2257, %v2338
        %v2340 = vadd.f32 %v2262, %v2338
        %v2341 = vadd.f32 %v2267, %v2338
        %v2342 = vadd.f32 %v2272, %v2338
        %v2343 = vadd.f32 %v2277, %v2338
        %v2344 = vadd.f32 %v2282, %v2338
        %v2345 = vadd.f32 %v2287, %v2338
        %v2346 = vadd.f32 %v2292, %v2338
        %v2347 = vadd.f32 %v2297, %v2338
        %v2348 = vadd.f32 %v2302, %v2338
        %v2349 = vadd.f32 %v2307, %v2338
        %v2350 = vadd.f32 %v2312, %v2338
        %v2351 = vadd.f32 %v2317, %v2338
        %v2352 = vadd.f32 %v2322, %v2338
        %v2353 = vadd.f32 %v2327, %v2338
        %v2354 = vadd.f32 %v2332, %v2338
        %vm2355 = vcmp.ge.f32.partialorder %v2339, 0.0
        %vm2356 = vcmp.ge.f32.partialorder %v2340, 0.0
        %vm2357 = vcmp.ge.f32.partialorder %v2341, 0.0
        %vm2358 = vcmp.ge.f32.partialorder %v2342, 0.0
        %vm2359 = vcmp.ge.f32.partialorder %v2343, 0.0
        %vm2360 = vcmp.ge.f32.partialorder %v2344, 0.0
        %vm2361 = vcmp.ge.f32.partialorder %v2345, 0.0
        %vm2362 = vcmp.ge.f32.partialorder %v2346, 0.0
        %vm2363 = vcmp.ge.f32.partialorder %v2347, 0.0
        %vm2364 = vcmp.ge.f32.partialorder %v2348, 0.0
        %vm2365 = vcmp.ge.f32.partialorder %v2349, 0.0
        %vm2366 = vcmp.ge.f32.partialorder %v2350, 0.0
        %vm2367 = vcmp.ge.f32.partialorder %v2351, 0.0
        %vm2368 = vcmp.ge.f32.partialorder %v2352, 0.0
        %vm2369 = vcmp.ge.f32.partialorder %v2353, 0.0
        %vm2370 = vcmp.ge.f32.partialorder %v2354, 0.0
        %v2371 = vmul.f32 %v2339, 0.01
        %v2372 = vmul.f32 %v2340, 0.01
        %v2373 = vmul.f32 %v2341, 0.01
        %v2374 = vmul.f32 %v2342, 0.01
        %v2375 = vmul.f32 %v2343, 0.01
        %v2376 = vmul.f32 %v2344, 0.01
        %v2377 = vmul.f32 %v2345, 0.01
        %v2378 = vmul.f32 %v2346, 0.01
        %v2379 = vmul.f32 %v2347, 0.01
        %v2380 = vmul.f32 %v2348, 0.01
        %v2381 = vmul.f32 %v2349, 0.01
        %v2382 = vmul.f32 %v2350, 0.01
        %v2383 = vmul.f32 %v2351, 0.01
        %v2384 = vmul.f32 %v2352, 0.01
        %v2385 = vmul.f32 %v2353, 0.01
        %v2386 = vmul.f32 %v2354, 0.01
        %v2387 = vsel %vm2355, %v2339, %v2371
        %v2388 = vsel %vm2356, %v2340, %v2372
        %v2389 = vsel %vm2357, %v2341, %v2373
        %v2390 = vsel %vm2358, %v2342, %v2374
        %v2391 = vsel %vm2359, %v2343, %v2375
        %v2392 = vsel %vm2360, %v2344, %v2376
        %v2393 = vsel %vm2361, %v2345, %v2377
        %v2394 = vsel %vm2362, %v2346, %v2378
        %v2395 = vsel %vm2363, %v2347, %v2379
        %v2396 = vsel %vm2364, %v2348, %v2380
        %v2397 = vsel %vm2365, %v2349, %v2381
        %v2398 = vsel %vm2366, %v2350, %v2382
        %v2399 = vsel %vm2367, %v2351, %v2383
        %v2400 = vsel %vm2368, %v2352, %v2384
        %v2401 = vsel %vm2369, %v2353, %v2385
        %v2402 = vsel %vm2370, %v2354, %v2386
        %v2403 = vlaneseq
        %v2404 = vshrl.u32 %v2403, 7
        %v2405 = vsub.s32 7, %v2404
        %v2406 = vrot.slane %v676, %v2405
        %v2407 = vmul.f32 %v2387, %v2406
        %v2408 = vmul.f32 %v2388, %v2406
        %v2409 = vmul.f32 %v2389, %v2406
        %v2410 = vmul.f32 %v2390, %v2406
        %v2411 = vmul.f32 %v2391, %v2406
        %v2412 = vmul.f32 %v2392, %v2406
        %v2413 = vmul.f32 %v2393, %v2406
        %v2414 = vmul.f32 %v2394, %v2406
        %v2415 = vmul.f32 %v2395, %v2406
        %v2416 = vmul.f32 %v2396, %v2406
        %v2417 = vmul.f32 %v2397, %v2406
        %v2418 = vmul.f32 %v2398, %v2406
        %v2419 = vmul.f32 %v2399, %v2406
        %v2420 = vmul.f32 %v2400, %v2406
        %v2421 = vmul.f32 %v2401, %v2406
        %v2422 = vmul.f32 %v2402, %v2406
        %v2423 = vlaneseq
        %v2424 = vshrl.u32 %v2423, 7
        %v2425 = vsub.s32 0, %v2424
        %v2426 = vrot.slane %v677, %v2425
        %v2427 = vadd.f32 %v2407, %v2426
        %v2428 = vadd.f32 %v2408, %v2426
        %v2429 = vadd.f32 %v2409, %v2426
        %v2430 = vadd.f32 %v2410, %v2426
        %v2431 = vadd.f32 %v2411, %v2426
        %v2432 = vadd.f32 %v2412, %v2426
        %v2433 = vadd.f32 %v2413, %v2426
        %v2434 = vadd.f32 %v2414, %v2426
        %v2435 = vadd.f32 %v2415, %v2426
        %v2436 = vadd.f32 %v2416, %v2426
        %v2437 = vadd.f32 %v2417, %v2426
        %v2438 = vadd.f32 %v2418, %v2426
        %v2439 = vadd.f32 %v2419, %v2426
        %v2440 = vadd.f32 %v2420, %v2426
        %v2441 = vadd.f32 %v2421, %v2426
        %v2442 = vadd.f32 %v2422, %v2426
        %v2443 = vld [vmem:[%s658] sm:$0xff]
        %v2444 = vld [vmem:[%s658 + $0x8] sm:$0xff]
        %v2445 = vld [vmem:[%s658 + $0x10] sm:$0xff]
        %v2446 = vld [vmem:[%s658 + $0x18] sm:$0xff]
        %v2447 = vld [vmem:[%s658 + $0x20] sm:$0xff]
        %v2448 = vld [vmem:[%s658 + $0x28] sm:$0xff]
        %v2449 = vld [vmem:[%s658 + $0x30] sm:$0xff]
        %v2450 = vld [vmem:[%s658 + $0x38] sm:$0xff]
        %v2451 = vld [vmem:[%s658 + $0x40] sm:$0xff]
        %v2452 = vld [vmem:[%s658 + $0x48] sm:$0xff]
        %v2453 = vld [vmem:[%s658 + $0x50] sm:$0xff]
        %v2454 = vld [vmem:[%s658 + $0x58] sm:$0xff]
        %v2455 = vld [vmem:[%s658 + $0x60] sm:$0xff]
        %v2456 = vld [vmem:[%s658 + $0x68] sm:$0xff]
        %v2457 = vld [vmem:[%s658 + $0x70] sm:$0xff]
        %v2458 = vld [vmem:[%s658 + $0x78] sm:$0xff]
        %v2459 = vmul.f32 %v2427, 0.1
        %v2460 = vmul.f32 %v2428, 0.1
        %v2461 = vmul.f32 %v2429, 0.1
        %v2462 = vmul.f32 %v2430, 0.1
        %v2463 = vmul.f32 %v2431, 0.1
        %v2464 = vmul.f32 %v2432, 0.1
        %v2465 = vmul.f32 %v2433, 0.1
        %v2466 = vmul.f32 %v2434, 0.1
        %v2467 = vmul.f32 %v2435, 0.1
        %v2468 = vmul.f32 %v2436, 0.1
        %v2469 = vmul.f32 %v2437, 0.1
        %v2470 = vmul.f32 %v2438, 0.1
        %v2471 = vmul.f32 %v2439, 0.1
        %v2472 = vmul.f32 %v2440, 0.1
        %v2473 = vmul.f32 %v2441, 0.1
        %v2474 = vmul.f32 %v2442, 0.1
        %v2475 = vadd.f32 %v2443, %v2459
        %v2476 = vadd.f32 %v2444, %v2460
        %v2477 = vadd.f32 %v2445, %v2461
        %v2478 = vadd.f32 %v2446, %v2462
        %v2479 = vadd.f32 %v2447, %v2463
        %v2480 = vadd.f32 %v2448, %v2464
        %v2481 = vadd.f32 %v2449, %v2465
        %v2482 = vadd.f32 %v2450, %v2466
        %v2483 = vadd.f32 %v2451, %v2467
        %v2484 = vadd.f32 %v2452, %v2468
        %v2485 = vadd.f32 %v2453, %v2469
        %v2486 = vadd.f32 %v2454, %v2470
        %v2487 = vadd.f32 %v2455, %v2471
        %v2488 = vadd.f32 %v2456, %v2472
        %v2489 = vadd.f32 %v2457, %v2473
        %v2490 = vadd.f32 %v2458, %v2474
        %2491 = vst [vmem:[%s658] sm:$0xff] %v2475
        %2492 = vst [vmem:[%s658 + $0x8] sm:$0xff] %v2476
        %2493 = vst [vmem:[%s658 + $0x10] sm:$0xff] %v2477
        %2494 = vst [vmem:[%s658 + $0x18] sm:$0xff] %v2478
        %2495 = vst [vmem:[%s658 + $0x20] sm:$0xff] %v2479
        %2496 = vst [vmem:[%s658 + $0x28] sm:$0xff] %v2480
        %2497 = vst [vmem:[%s658 + $0x30] sm:$0xff] %v2481
        %2498 = vst [vmem:[%s658 + $0x38] sm:$0xff] %v2482
        %2499 = vst [vmem:[%s658 + $0x40] sm:$0xff] %v2483
        %2500 = vst [vmem:[%s658 + $0x48] sm:$0xff] %v2484
        %2501 = vst [vmem:[%s658 + $0x50] sm:$0xff] %v2485
        %2502 = vst [vmem:[%s658 + $0x58] sm:$0xff] %v2486
        %2503 = vst [vmem:[%s658 + $0x60] sm:$0xff] %v2487
        %2504 = vst [vmem:[%s658 + $0x68] sm:$0xff] %v2488
        %2505 = vst [vmem:[%s658 + $0x70] sm:$0xff] %v2489
        %2506 = vst [vmem:[%s658 + $0x78] sm:$0xff] %v2490
        %s2507 = sand.u32 %s280, 1
        %s2508 = scalar_lea.sflag [#allocation4], %s2507
        %s2509 = sand.u32 %s280, 1
        %s2510 = smul.addr %s2509, 128
        %s2511 = scalar_lea.vmem [#allocation17], %s2510
        // Predicated region
        $region93: #{tpu_custom_call.1} parent=55 // pred_check
          %p2512 = pneg %p290
        $region94: #{tpu_custom_call.1} parent=55 // pred_check_branch
          %2514 = sbr.rel (%p2512) target = $region96
        $region95: #{tpu_custom_call.1} parent=55 // pred_region
          %s2516 = ssub.s32 2048, 2048
          %2517 = vsyncadd %s2508, %s2516
          %s2518 = smul.addr %s38, 16
          %s2519 = smul.addr %s2518, 128
          %s2520 = scalar_lea.hbm %s9, %s2519
          %s2521 = sshll.u32 %s2511, 4
          %s2522 = int_to_ptr.vmem [resolvable:$true] %s2521
          %2527 = dma.vmem_to_hbm [thread:$0]  %s2522, 2048, %s2520, %s2508, 128, 128, 8
        $region96: #{tpu_custom_call.1} parent=55 // pred_fallthru
          _
      $region56: #{tpu_custom_call.1} parent=5 // pred_fallthru
        _
      %p2528 = scmp.le.s32.totalorder 2, %s33
      // Predicated region
      $region97: #{tpu_custom_call.1} parent=5 // pred_check
        %p2529 = pneg %p2528
      $region98: #{tpu_custom_call.1} parent=5 // pred_check_branch
        %2531 = sbr.rel (%p2529) target = $region100
      $region99: #{tpu_custom_call.1} parent=5 // pred_region
        %s2532 = ssub.s32 %s33, 2
        // Predicated region
        $region101: #{tpu_custom_call.1} parent=99 // pred_check
          %p2533 = pneg %p296
        $region102: #{tpu_custom_call.1} parent=99 // pred_check_branch
          %2535 = sbr.rel (%p2533) target = $region104
        $region103: #{tpu_custom_call.1} parent=99 // pred_region
          %s2536 = sand.u32 %s281, 1
          %s2537 = scalar_lea.sflag [#allocation4], %s2536
          %s2538 = sand.u32 %s281, 1
          %s2539 = smul.addr %s2538, 128
          %s2540 = scalar_lea.vmem [#allocation17], %s2539
          %2541 = dma.done %s2537, 2048
        $region104: #{tpu_custom_call.1} parent=99 // pred_fallthru
          _
      $region100: #{tpu_custom_call.1} parent=5 // pred_fallthru
        _
    $region6: #{tpu_custom_call.1} parent=1 // loop_footer
      %s37 = sadd.s32 1, %s33
    $region7: #{tpu_custom_call.1} parent=1 // loop_footer_branch
      %32 = sbr.rel target = $region3
    $region8: #{tpu_custom_call.1} parent=1 // loop_exit
      _
    %2542 = vsyncpa [#allocation3], 1
    %s2543 = scalar_lea.sflag [#allocation3], 1
    %2544 = vsyncpa %s2543, 1
    %2545 = vsyncpa [#allocation6], 1
    %s2546 = scalar_lea.sflag [#allocation6], 1
    %2547 = vsyncpa %s2546, 1
    %2548 = vsyncpa [#allocation9], 1
    %s2549 = scalar_lea.sflag [#allocation9], 1
    %2550 = vsyncpa %s2549, 1
    %2551 = vsyncpa [#allocation12], 1
    %s2552 = scalar_lea.sflag [#allocation12], 1
    %2553 = vsyncpa %s2552, 1
    %2554 = vsyncpa [#allocation15], 1
    %s2555 = scalar_lea.sflag [#allocation15], 1
    %2556 = vsyncpa %s2555, 1
    %2557 = vsyncpa [#allocation4], 1
    %s2558 = scalar_lea.sflag [#allocation4], 1
    %2559 = vsyncpa %s2558, 1

</llo_original>
